<compile_context>
chip_gen: v7x
topology: tpu7x:2x2x1
jax: 0.10.0
libtpu: 0.0.40
codegen_flags: <defaults>
</compile_context>

<pallas_src>
import functools

import jax
import jax.numpy as jnp
from jax.experimental import pallas as pl
from jax.experimental.pallas import tpu as pltpu


_TILE_TARGET = 2048              # rows / lanes of work per grid step
_VMEM_LIMIT = 48 * 1024 * 1024   # fits v7x (64 MiB physical); ample on v5e/v6e


def _round_up(x, m):
    return -(-x // m) * m


def _balanced_tiles(extent, align, target=_TILE_TARGET):
    """Return (tile, num_tiles).  Small extents use one full-extent block
    (always a legal BlockSpec); large extents use balanced, `align`-aligned
    tiles with an even tile count so v7x's 2-TC 'parallel' split is even."""
    if extent <= target:
        return extent, 1
    nt = pl.cdiv(extent, target)
    if nt % 2:
        nt += 1
    tile = _round_up(pl.cdiv(extent, nt), align)
    nt = pl.cdiv(extent, tile)
    if nt > 1 and nt % 2:
        nt += 1
    return tile, nt


# --------------------------------------------------------------------------
# Kernels
# --------------------------------------------------------------------------
def _qenc_rows_kernel(x_ref, w1_ref, t1_ref, w2_ref, t2_ref, w3_ref, t3_ref,
                      o_ref):
    """Row-slab layout: x (TM, C_in), w_l (Cin_l, Cout_l), t_l (1, Cout_l)."""
    h = jnp.dot(x_ref[...], w1_ref[...], preferred_element_type=jnp.float32)
    h = jnp.maximum(h + t1_ref[...], 0.0)
    h = jnp.dot(h.astype(jnp.bfloat16), w2_ref[...],
                preferred_element_type=jnp.float32)
    h = jnp.maximum(h + t2_ref[...], 0.0)
    h = jnp.dot(h.astype(jnp.bfloat16), w3_ref[...],
                preferred_element_type=jnp.float32)
    h = jnp.maximum(h + t3_ref[...], 0.0)
    o_ref[...] = h.astype(o_ref.dtype)


def _qenc_cfirst_kernel(x_ref, w1_ref, t1_ref, w2_ref, t2_ref, w3_ref, t3_ref,
                        o_ref):
    """Channels-first layout: x (C_in, THW), w_l (Cout_l, Cin_l),
    t_l (Cout_l, 1).  Output is (C_out, THW) == NCHW order directly."""
    h = jnp.dot(w1_ref[...], x_ref[...], preferred_element_type=jnp.float32)
    h = jnp.maximum(h + t1_ref[...], 0.0)
    h = jnp.dot(w2_ref[...], h.astype(jnp.bfloat16),
                preferred_element_type=jnp.float32)
    h = jnp.maximum(h + t2_ref[...], 0.0)
    h = jnp.dot(w3_ref[...], h.astype(jnp.bfloat16),
                preferred_element_type=jnp.float32)
    h = jnp.maximum(h + t3_ref[...], 0.0)
    o_ref[...] = h.astype(o_ref.dtype)


# --------------------------------------------------------------------------
# Wrapper
# --------------------------------------------------------------------------
def _fold_bn(conv_b, gamma, beta, running_mean, running_var, eps=1e-5):
    """Fold conv bias + inference-mode BatchNorm into per-channel scale/shift."""
    scale = gamma / jnp.sqrt(running_var + eps)              # (C,)
    shift = (conv_b - running_mean) * scale + beta           # (C,)
    return scale, shift


def _prep_weights(params):
    """Fold BN scale into the (C_in, C_out) weights; bf16 operands, f32 shifts."""
    folded = []
    for (w, s, t) in params:
        folded.append(((w * s[None, :]).astype(jnp.bfloat16),
                       t.astype(jnp.float32)))
    return folded


@functools.partial(jax.jit, static_argnames=("out_dtype",))
def query_encoder(x_nchw, params, out_dtype=jnp.float32):
    """Fused QueryEncoder forward.

    x_nchw: (N, C_in, H, W) float32.
    params: 3-tuple of (w:(Cin,Cout), bn_scale:(Cout,), bn_shift:(Cout,)).
    Returns (N, out_ch, H, W) in `out_dtype` (f32 by default; bf16 halves the
    output writeback if the consumer tolerates it).
    """
    N, C_in, H, W = x_nchw.shape
    (w1, t1), (w2, t2), (w3, t3) = _prep_weights(params)
    hid = w1.shape[1]
    out_ch = w3.shape[1]
    HW = H * W
    out_isize = jnp.dtype(out_dtype).itemsize

    flops = 2 * N * HW * (C_in * hid + hid * hid + hid * out_ch)
    weight_bytes = 2 * (C_in * hid + hid * hid + hid * out_ch) + 4 * (2 * hid + out_ch)

    if HW >= 128:
        # ---- channels-first path: no wrapper transposes; output lands in NCHW.
        thw, n_hw = _balanced_tiles(HW, 128)
        HW_pad = thw * n_hw
        x3 = x_nchw.reshape(N, C_in, HW).astype(jnp.bfloat16)
        if HW_pad != HW:
            x3 = jnp.pad(x3, ((0, 0), (0, 0), (0, HW_pad - HW)))

        full = lambda n, j: (0, 0)
        cost = pl.CostEstimate(
            flops=flops, transcendentals=0,
            bytes_accessed=N * HW_pad * (C_in * 2 + out_ch * out_isize) + weight_bytes)

        out3 = pl.pallas_call(
            _qenc_cfirst_kernel,
            out_shape=jax.ShapeDtypeStruct((N, out_ch, HW_pad), out_dtype),
            grid_spec=pltpu.PrefetchScalarGridSpec(
                num_scalar_prefetch=0,
                grid=(N, n_hw),
                in_specs=[
                    pl.BlockSpec((None, C_in, thw), lambda n, j: (n, 0, j)),
                    pl.BlockSpec((hid, C_in), full),
                    pl.BlockSpec((hid, 1), full),
                    pl.BlockSpec((hid, hid), full),
                    pl.BlockSpec((hid, 1), full),
                    pl.BlockSpec((out_ch, hid), full),
                    pl.BlockSpec((out_ch, 1), full),
                ],
                out_specs=pl.BlockSpec((None, out_ch, thw), lambda n, j: (n, 0, j)),
            ),
            compiler_params=pltpu.CompilerParams(
                dimension_semantics=("parallel", "parallel"),
                vmem_limit_bytes=_VMEM_LIMIT),
            cost_estimate=cost,
        )(x3,
          w1.T, t1.reshape(-1, 1),
          w2.T, t2.reshape(-1, 1),
          w3.T, t3.reshape(-1, 1))

        if HW_pad != HW:
            out3 = out3[:, :, :HW]        # drop padded spatial columns
        return out3.reshape(N, out_ch, H, W)

    # ---- flattened-rows fallback (tiny spatial extent): (M, C_in) slab.
    M = N * HW
    tm, grid_m = _balanced_tiles(M, 16)   # 16: bf16 sublane packing
    M_pad = tm * grid_m
    x2d = jnp.transpose(x_nchw, (0, 2, 3, 1)).reshape(M, C_in)
    if M_pad != M:
        x2d = jnp.pad(x2d, ((0, M_pad - M), (0, 0)))
    x2d = x2d.astype(jnp.bfloat16)

    full = lambda i: (0, 0)
    cost = pl.CostEstimate(
        flops=flops, transcendentals=0,
        bytes_accessed=M_pad * (C_in * 2 + out_ch * out_isize) + weight_bytes)

    out2d = pl.pallas_call(
        _qenc_rows_kernel,
        out_shape=jax.ShapeDtypeStruct((M_pad, out_ch), out_dtype),
        grid_spec=pltpu.PrefetchScalarGridSpec(
            num_scalar_prefetch=0,
            grid=(grid_m,),
            in_specs=[
                pl.BlockSpec((tm, C_in), lambda i: (i, 0)),
                pl.BlockSpec((C_in, hid), full),
                pl.BlockSpec((1, hid), full),
                pl.BlockSpec((hid, hid), full),
                pl.BlockSpec((1, hid), full),
                pl.BlockSpec((hid, out_ch), full),
                pl.BlockSpec((1, out_ch), full),
            ],
            out_specs=pl.BlockSpec((tm, out_ch), lambda i: (i, 0)),
        ),
        compiler_params=pltpu.CompilerParams(
            dimension_semantics=("parallel",),
            vmem_limit_bytes=_VMEM_LIMIT),
        cost_estimate=cost,
    )(x2d,
      w1, t1.reshape(1, -1),
      w2, t2.reshape(1, -1),
      w3, t3.reshape(1, -1))

    out2d = out2d[:M]                     # drop padded rows
    return jnp.transpose(out2d.reshape(N, H, W, out_ch), (0, 3, 1, 2))


# --------------------------------------------------------------------------
# Test harness
# --------------------------------------------------------------------------
def _make_layer_params(key, c_in, c_out):
    """Deterministic synthetic weights for conv(1x1) + BatchNorm."""
    k = jax.random.split(key, 6)
    # PyTorch conv weight is (C_out, C_in, 1, 1); stored here in matmul form.
    w = jax.random.normal(k[0], (c_in, c_out), jnp.float32) * (1.0 / jnp.sqrt(c_in))
    b = jax.random.normal(k[1], (c_out,), jnp.float32) * 0.1
    gamma = 1.0 + 0.1 * jax.random.normal(k[2], (c_out,), jnp.float32)
    beta = 0.1 * jax.random.normal(k[3], (c_out,), jnp.float32)
    rmean = 0.1 * jax.random.normal(k[4], (c_out,), jnp.float32)
    rvar = jnp.abs(1.0 + 0.1 * jax.random.normal(k[5], (c_out,), jnp.float32))
    scale, shift = _fold_bn(b, gamma, beta, rmean, rvar)
    return w, scale, shift


def _reference(x_nchw, params):
    """Plain-JAX f32 reference of the same (inference-mode BN) forward."""
    N, C_in, H, W = x_nchw.shape
    h = jnp.transpose(x_nchw, (0, 2, 3, 1)).reshape(N * H * W, C_in)
    for (w, s, t) in params:
        h = jnp.maximum((h @ w) * s + t, 0.0)
    out_ch = params[-1][0].shape[1]
    return jnp.transpose(h.reshape(N, H, W, out_ch), (0, 3, 1, 2))


if __name__ == "__main__":
    # QueryEncoder hard-codes hidden=512; small in_ch/out_ch/spatial for test.
    IN_CH, HID, OUT_CH = 16, 512, 128

    key = jax.random.PRNGKey(0)
    kx1, kx2, k1, k2, k3 = jax.random.split(key, 5)
    params = (
        _make_layer_params(k1, IN_CH, HID),
        _make_layer_params(k2, HID, HID),
        _make_layer_params(k3, HID, OUT_CH),
    )

    # Shape A exercises the flattened-rows fallback (H*W = 64 < 128).
    xa = jax.random.normal(kx1, (2, IN_CH, 8, 8), jnp.float32)
    # Shape B exercises the transpose-free channels-first path (H*W = 256).
    xb = jax.random.normal(kx2, (2, IN_CH, 16, 16), jnp.float32)

    for x in (xa, xb):
        out = jax.block_until_ready(query_encoder(x, params))
        ref = _reference(x, params)
        N, _, H, W = x.shape
        assert out.shape == (N, OUT_CH, H, W), out.shape
        # bf16 matmul operands -> looser tolerance than a pure-f32 path.
        assert jnp.allclose(out, ref, rtol=5e-2, atol=5e-2), "mismatch vs reference"

    print("KERNEL_OK")
</pallas_src>

<mosaic_0001>
module attributes {stable_mosaic.version = 11 : i64} {
  func.func @_qenc_rows_kernel(%arg0: i32, %arg1: memref<128x16xbf16, #tpu.memory_space<vmem>>, %arg2: memref<16x512xbf16, #tpu.memory_space<vmem>>, %arg3: memref<1x512xf32, #tpu.memory_space<vmem>>, %arg4: memref<512x512xbf16, #tpu.memory_space<vmem>>, %arg5: memref<1x512xf32, #tpu.memory_space<vmem>>, %arg6: memref<512x128xbf16, #tpu.memory_space<vmem>>, %arg7: memref<1x128xf32, #tpu.memory_space<vmem>>, %arg8: memref<128x128xf32, #tpu.memory_space<vmem>>) attributes {dimension_semantics = [#tpu.dimension_semantics<parallel>], iteration_bounds = array<i64: 1>, scalar_prefetch = 0 : i64, scratch_operands = 0 : i64, tpu.core_type = #tpu.core_type<tc>, window_params = [{transform_indices = @transform_0, window_bounds = array<i64: 128, 16>}, {pipeline_mode = #tpu.pipeline_mode<synchronous>, transform_indices = @transform_1, window_bounds = array<i64: 16, 512>}, {pipeline_mode = #tpu.pipeline_mode<synchronous>, transform_indices = @transform_2, window_bounds = array<i64: 1, 512>}, {pipeline_mode = #tpu.pipeline_mode<synchronous>, transform_indices = @transform_3, window_bounds = array<i64: 512, 512>}, {pipeline_mode = #tpu.pipeline_mode<synchronous>, transform_indices = @transform_4, window_bounds = array<i64: 1, 512>}, {pipeline_mode = #tpu.pipeline_mode<synchronous>, transform_indices = @transform_5, window_bounds = array<i64: 512, 128>}, {pipeline_mode = #tpu.pipeline_mode<synchronous>, transform_indices = @transform_6, window_bounds = array<i64: 1, 128>}, {transform_indices = @transform_7, window_bounds = array<i64: 128, 128>}]} {
    %c0 = arith.constant 0 : index
    %c0_0 = arith.constant 0 : index
    %0 = vector.load %arg1[%c0, %c0_0] : memref<128x16xbf16, #tpu.memory_space<vmem>>, vector<128x16xbf16>
    %c0_1 = arith.constant 0 : index
    %c0_2 = arith.constant 0 : index
    %1 = vector.load %arg2[%c0_1, %c0_2] : memref<16x512xbf16, #tpu.memory_space<vmem>>, vector<16x512xbf16>
    %cst = arith.constant dense<0.000000e+00> : vector<128x512xf32>
    %2 = tpu.matmul %0, %1, %cst {dimension_numbers = #tpu.dot_dimension_numbers<[1], [0], [0], [1], [0, 0, 1, 1], [], []>} : vector<128x16xbf16>, vector<16x512xbf16>, vector<128x512xf32> -> vector<128x512xf32>
    %c0_3 = arith.constant 0 : index
    %c0_4 = arith.constant 0 : index
    %3 = vector.load %arg3[%c0_3, %c0_4] : memref<1x512xf32, #tpu.memory_space<vmem>>, vector<1x512xf32>
    %4 = vector.broadcast %3 : vector<1x512xf32> to vector<128x512xf32>
    %5 = arith.addf %2, %4 : vector<128x512xf32>
    %cst_5 = arith.constant 0.000000e+00 : f32
    %6 = vector.broadcast %cst_5 : f32 to vector<128x512xf32>
    %7 = arith.maximumf %5, %6 : vector<128x512xf32>
    %8 = arith.truncf %7 : vector<128x512xf32> to vector<128x512xbf16>
    %c0_6 = arith.constant 0 : index
    %c0_7 = arith.constant 0 : index
    %9 = vector.load %arg4[%c0_6, %c0_7] : memref<512x512xbf16, #tpu.memory_space<vmem>>, vector<512x512xbf16>
    %cst_8 = arith.constant dense<0.000000e+00> : vector<128x512xf32>
    %10 = tpu.matmul %8, %9, %cst_8 {dimension_numbers = #tpu.dot_dimension_numbers<[1], [0], [0], [1], [0, 0, 1, 1], [], []>} : vector<128x512xbf16>, vector<512x512xbf16>, vector<128x512xf32> -> vector<128x512xf32>
    %c0_9 = arith.constant 0 : index
    %c0_10 = arith.constant 0 : index
    %11 = vector.load %arg5[%c0_9, %c0_10] : memref<1x512xf32, #tpu.memory_space<vmem>>, vector<1x512xf32>
    %12 = vector.broadcast %11 : vector<1x512xf32> to vector<128x512xf32>
    %13 = arith.addf %10, %12 : vector<128x512xf32>
    %cst_11 = arith.constant 0.000000e+00 : f32
    %14 = vector.broadcast %cst_11 : f32 to vector<128x512xf32>
    %15 = arith.maximumf %13, %14 : vector<128x512xf32>
    %16 = arith.truncf %15 : vector<128x512xf32> to vector<128x512xbf16>
    %c0_12 = arith.constant 0 : index
    %c0_13 = arith.constant 0 : index
    %17 = vector.load %arg6[%c0_12, %c0_13] : memref<512x128xbf16, #tpu.memory_space<vmem>>, vector<512x128xbf16>
    %cst_14 = arith.constant dense<0.000000e+00> : vector<128x128xf32>
    %18 = tpu.matmul %16, %17, %cst_14 {dimension_numbers = #tpu.dot_dimension_numbers<[1], [0], [0], [1], [0, 0, 1, 1], [], []>} : vector<128x512xbf16>, vector<512x128xbf16>, vector<128x128xf32> -> vector<128x128xf32>
    %c0_15 = arith.constant 0 : index
    %c0_16 = arith.constant 0 : index
    %19 = vector.load %arg7[%c0_15, %c0_16] : memref<1x128xf32, #tpu.memory_space<vmem>>, vector<1x128xf32>
    %20 = vector.broadcast %19 : vector<1x128xf32> to vector<128x128xf32>
    %21 = arith.addf %18, %20 : vector<128x128xf32>
    %cst_17 = arith.constant 0.000000e+00 : f32
    %22 = vector.broadcast %cst_17 : f32 to vector<128x128xf32>
    %23 = arith.maximumf %21, %22 : vector<128x128xf32>
    %c0_18 = arith.constant 0 : index
    %c0_19 = arith.constant 0 : index
    %24 = vector.load %arg8[%c0_18, %c0_19] : memref<128x128xf32, #tpu.memory_space<vmem>>, vector<128x128xf32>
    tpu.vector_store %arg8[%c0_18, %c0_19], %23 {strides = array<i32>} : memref<128x128xf32, #tpu.memory_space<vmem>>, vector<128x128xf32>,
    return
  }
  func.func @transform_0(%arg0: i32) -> (i32, i32) {
    %c0_i32 = arith.constant 0 : i32
    %c0_i32_0 = arith.constant 0 : i32
    return %arg0, %c0_i32 : i32, i32
  }
  func.func @transform_1(%arg0: i32) -> (i32, i32) {
    %c0_i32 = arith.constant 0 : i32
    %c0_i32_0 = arith.constant 0 : i32
    %c0_i32_1 = arith.constant 0 : i32
    return %c0_i32, %c0_i32_0 : i32, i32
  }
  func.func @transform_2(%arg0: i32) -> (i32, i32) {
    %c0_i32 = arith.constant 0 : i32
    %c0_i32_0 = arith.constant 0 : i32
    %c0_i32_1 = arith.constant 0 : i32
    return %c0_i32, %c0_i32_0 : i32, i32
  }
  func.func @transform_3(%arg0: i32) -> (i32, i32) {
    %c0_i32 = arith.constant 0 : i32
    %c0_i32_0 = arith.constant 0 : i32
    %c0_i32_1 = arith.constant 0 : i32
    return %c0_i32, %c0_i32_0 : i32, i32
  }
  func.func @transform_4(%arg0: i32) -> (i32, i32) {
    %c0_i32 = arith.constant 0 : i32
    %c0_i32_0 = arith.constant 0 : i32
    %c0_i32_1 = arith.constant 0 : i32
    return %c0_i32, %c0_i32_0 : i32, i32
  }
  func.func @transform_5(%arg0: i32) -> (i32, i32) {
    %c0_i32 = arith.constant 0 : i32
    %c0_i32_0 = arith.constant 0 : i32
    %c0_i32_1 = arith.constant 0 : i32
    return %c0_i32, %c0_i32_0 : i32, i32
  }
  func.func @transform_6(%arg0: i32) -> (i32, i32) {
    %c0_i32 = arith.constant 0 : i32
    %c0_i32_0 = arith.constant 0 : i32
    %c0_i32_1 = arith.constant 0 : i32
    return %c0_i32, %c0_i32_0 : i32, i32
  }
  func.func @transform_7(%arg0: i32) -> (i32, i32) {
    %c0_i32 = arith.constant 0 : i32
    %c0_i32_0 = arith.constant 0 : i32
    return %arg0, %c0_i32 : i32, i32
  }
}

</mosaic_0001>

<llo_original>
// kernel: query_encoder.1
$region0: #{query_encoder.1}
  #allocation0 [shape = 'u32[]', space=smem, size = 0x4, offset = 0x4, fixed_abs, tag = 'smem constant byte address 0x4 - core index']
  #allocation1 [shape = 'u32[144,128]{1,0:T(1,128)}', space=vmem, size = 0x12000, scoped, tag = 'internal scratch']
  %s0 = inlined_call_operand.vmem [shape: bf16[128,16], index: 0, kind: input, shape index: {}]
  %s1 = inlined_call_operand.vmem [shape: bf16[16,512], index: 1, kind: input, shape index: {}]
  %s2 = inlined_call_operand.vmem [shape: f32[1,512], index: 2, kind: input, shape index: {}]
  %s3 = inlined_call_operand.vmem [shape: bf16[512,512], index: 3, kind: input, shape index: {}]
  %s4 = inlined_call_operand.vmem [shape: f32[1,512], index: 4, kind: input, shape index: {}]
  %s5 = inlined_call_operand.vmem [shape: bf16[512,128], index: 5, kind: input, shape index: {}]
  %s6 = inlined_call_operand.vmem [shape: f32[1,128], index: 6, kind: input, shape index: {}]
  %s7 = inlined_call_operand.hbm [shape: f32[128,128], index: 7, kind: output, shape index: {}]
  %s8 = sld [smem:[#allocation0]]
  $region38: #{query_encoder.1} parent=0
    _
  %s10 = ssub.s32 1, %s8
  %s11 = scalar_select 0, %s10, %s8
  $region1: #{query_encoder.1} parent=0
    #allocation2 [shape = 'u8[65536]{0}', space=vmem, size = 0x10000, scoped, tag = 'output window, operand 0, single buffered']
    #allocation3 [shape = 's32[1]{0}', space=sflag, size = 0x4, scoped, tag = 'scoped memory for query_encoder.1']
    %12 = vsyncpa [#allocation3], 0
    // Predicated region
    $region2: #{query_encoder.1} parent=1 // pred_check
      _
    $region3: #{query_encoder.1} parent=1 // pred_check_branch
      %14 = sbr.rel (0) target = $region5
    $region4: #{query_encoder.1} parent=1 // pred_region
      _
    $region5: #{query_encoder.1} parent=1 // pred_fallthru
      _
    // Predicated region
    $region6: #{query_encoder.1} parent=1 // pred_check
      _
    $region7: #{query_encoder.1} parent=1 // pred_check_branch
      %16 = sbr.rel (0) target = $region9
    $region8: #{query_encoder.1} parent=1 // pred_region
      _
    $region9: #{query_encoder.1} parent=1 // pred_fallthru
      _
    // Predicated region
    $region10: #{query_encoder.1} parent=1 // pred_check
      _
    $region11: #{query_encoder.1} parent=1 // pred_check_branch
      %18 = sbr.rel (0) target = $region13
    $region12: #{query_encoder.1} parent=1 // pred_region
      _
    $region13: #{query_encoder.1} parent=1 // pred_fallthru
      _
    // Predicated region
    $region14: #{query_encoder.1} parent=1 // pred_check
      _
    $region15: #{query_encoder.1} parent=1 // pred_check_branch
      %20 = sbr.rel (0) target = $region17
    $region16: #{query_encoder.1} parent=1 // pred_region
      _
    $region17: #{query_encoder.1} parent=1 // pred_fallthru
      _
    // Predicated region
    $region18: #{query_encoder.1} parent=1 // pred_check
      _
    $region19: #{query_encoder.1} parent=1 // pred_check_branch
      %22 = sbr.rel (0) target = $region21
    $region20: #{query_encoder.1} parent=1 // pred_region
      _
    $region21: #{query_encoder.1} parent=1 // pred_fallthru
      _
    // Predicated region
    $region22: #{query_encoder.1} parent=1 // pred_check
      _
    $region23: #{query_encoder.1} parent=1 // pred_check_branch
      %24 = sbr.rel (0) target = $region25
    $region24: #{query_encoder.1} parent=1 // pred_region
      _
    $region25: #{query_encoder.1} parent=1 // pred_fallthru
      _
    // Predicated region
    $region26: #{query_encoder.1} parent=1 // pred_check
      _
    $region27: #{query_encoder.1} parent=1 // pred_check_branch
      %26 = sbr.rel (0) target = $region29
    $region28: #{query_encoder.1} parent=1 // pred_region
      _
    $region29: #{query_encoder.1} parent=1 // pred_fallthru
      _
    %v28 = vld [vmem:[%s0] sm:$0xf]
    %v29 = vld [vmem:[%s0 + $0x4] sm:$0xf]
    %v30 = vld [vmem:[%s0 + $0x8] sm:$0xf]
    %v31 = vld [vmem:[%s0 + $0xc] sm:$0xf]
    %v32 = vld [vmem:[%s0 + $0x10] sm:$0xf]
    %v33 = vld [vmem:[%s0 + $0x14] sm:$0xf]
    %v34 = vld [vmem:[%s0 + $0x18] sm:$0xf]
    %v35 = vld [vmem:[%s0 + $0x1c] sm:$0xf]
    %v36 = vld [vmem:[%s0 + $0x20] sm:$0xf]
    %v37 = vld [vmem:[%s0 + $0x24] sm:$0xf]
    %v38 = vld [vmem:[%s0 + $0x28] sm:$0xf]
    %v39 = vld [vmem:[%s0 + $0x2c] sm:$0xf]
    %v40 = vld [vmem:[%s0 + $0x30] sm:$0xf]
    %v41 = vld [vmem:[%s0 + $0x34] sm:$0xf]
    %v42 = vld [vmem:[%s0 + $0x38] sm:$0xf]
    %v43 = vld [vmem:[%s0 + $0x3c] sm:$0xf]
    %v44 = vld [vmem:[%s1] sm:$0xff]
    %v45 = vld [vmem:[%s1 + $0x8] sm:$0xff]
    %v46 = vld [vmem:[%s1 + $0x10] sm:$0xff]
    %v47 = vld [vmem:[%s1 + $0x18] sm:$0xff]
    %v48 = vld [vmem:[%s2] sm:$0xf]
    %v50 = vlaneseq
    %v51 = vshrl.u32 %v50, 7
    %v52 = vsub.s32 0, %v51
    %v53 = vrot.slane %v48, %v52
    %v54 = vlaneseq
    %v55 = vshrl.u32 %v54, 7
    %v56 = vsub.s32 1, %v55
    %v57 = vrot.slane %v48, %v56
    %v58 = vlaneseq
    %v59 = vshrl.u32 %v58, 7
    %v60 = vsub.s32 2, %v59
    %v61 = vrot.slane %v48, %v60
    %v62 = vlaneseq
    %v63 = vshrl.u32 %v62, 7
    %v64 = vsub.s32 3, %v63
    %v65 = vrot.slane %v48, %v64
    %v86 = vunpack.c.l.b16 %v28
    %v87 = vunpack.c.l.b16 %v29
    %v88 = vunpack.c.l.b16 %v30
    %v89 = vunpack.c.l.b16 %v31
    %v90 = vunpack.c.l.b16 %v32
    %v91 = vunpack.c.l.b16 %v33
    %v92 = vunpack.c.l.b16 %v34
    %v93 = vunpack.c.l.b16 %v35
    %v94 = vunpack.c.l.b16 %v36
    %v95 = vunpack.c.l.b16 %v37
    %v96 = vunpack.c.l.b16 %v38
    %v97 = vunpack.c.l.b16 %v39
    %v98 = vunpack.c.l.b16 %v40
    %v99 = vunpack.c.l.b16 %v41
    %v100 = vunpack.c.l.b16 %v42
    %v101 = vunpack.c.l.b16 %v43
    %v102 = vpack.c.b16 %v87, %v86
    %v103 = vpack.c.b16 %v89, %v88
    %v104 = vpack.c.b16 %v91, %v90
    %v105 = vpack.c.b16 %v93, %v92
    %v106 = vpack.c.b16 %v95, %v94
    %v107 = vpack.c.b16 %v97, %v96
    %v108 = vpack.c.b16 %v99, %v98
    %v109 = vpack.c.b16 %v101, %v100
    %v114 = vunpack.c.l.b16 %v44
    %v115 = vunpack.c.h.b16 %v44
    %v116 = vunpack.c.l.b16 %v45
    %v117 = vunpack.c.h.b16 %v45
    %v118 = vunpack.c.l.b16 %v46
    %v119 = vunpack.c.h.b16 %v46
    %v120 = vunpack.c.l.b16 %v47
    %v121 = vunpack.c.h.b16 %v47
    %v122 = vpack.c.b16 %v118, %v114
    %v123 = vpack.c.b16 %v119, %v115
    %v124 = vpack.c.b16 %v120, %v116
    %v125 = vpack.c.b16 %v121, %v117
    %vm130 = vcmask 130048
    %v132 = vsel %vm130, %v102, 0
    %v135 = vsel %vm130, %v103, 0
    %v138 = vsel %vm130, %v104, 0
    %v141 = vsel %vm130, %v105, 0
    %v144 = vsel %vm130, %v106, 0
    %v147 = vsel %vm130, %v107, 0
    %v150 = vsel %vm130, %v108, 0
    %v153 = vsel %vm130, %v109, 0
    %155 = vmatprep.subr.bf16.mxu0 %v123
    %156 = vmatpush1.bf16.msra.mxu0 %v122
    %157 = vmatprep.subr.bf16.mxu0 0
    %158 = vmatpush1.bf16.msra.mxu0 0
    %159 = vmatprep.subr.bf16.mxu0 0
    %160 = vmatpush1.bf16.msra.mxu0 0
    %161 = vmatprep.subr.bf16.mxu0 0
    %162 = vmatpush1.bf16.msra.mxu0 0
    %163 = vmatprep.subr.bf16.mxu0 0
    %164 = vmatpush1.bf16.msra.mxu0 0
    %165 = vmatprep.subr.bf16.mxu0 0
    %166 = vmatpush1.bf16.msra.mxu0 0
    %167 = vmatprep.subr.bf16.mxu0 0
    %168 = vmatpush1.bf16.msra.mxu0 0
    %169 = vmatprep.subr.bf16.mxu0 0
    %170 = vmatpush1.bf16.msra.mxu0 0
    %171 = vmatprep.subr.bf16.mxu0 0
    %172 = vmatpush1.bf16.msra.mxu0 0
    %173 = vmatprep.subr.bf16.mxu0 0
    %174 = vmatpush1.bf16.msra.mxu0 0
    %175 = vmatprep.subr.bf16.mxu0 0
    %176 = vmatpush1.bf16.msra.mxu0 0
    %177 = vmatprep.subr.bf16.mxu0 0
    %178 = vmatpush1.bf16.msra.mxu0 0
    %179 = vmatprep.subr.bf16.mxu0 0
    %180 = vmatpush1.bf16.msra.mxu0 0
    %181 = vmatprep.subr.bf16.mxu0 0
    %182 = vmatpush1.bf16.msra.mxu0 0
    %183 = vmatprep.subr.bf16.mxu0 0
    %184 = vmatpush1.bf16.msra.mxu0 0
    %185 = vmatprep.subr.bf16.mxu0 0
    %186 = vmatpush1.bf16.msra.mxu0 0
    %187 = vmatprep.mubr.bf16.mxu0 0
    %188 = vmatmul.mubr.bf16.gmra.mrb[0].mxu0 %v132
    %v189 = vpop.f32.mrb[0].mxu0
    %v190 = vadd.f32 %v53, %v189
    %v191 = vpop.f32.mrb[0].mxu0
    %v192 = vadd.f32 %v57, %v191
    %v193 = vpop.f32.mrb[0].mxu0
    %v194 = vadd.f32 %v53, %v193
    %v195 = vpop.f32.mrb[0].mxu0
    %v196 = vadd.f32 %v57, %v195
    %197 = vmatprep.mubr.bf16.mxu0 0
    %198 = vmatmul.mubr.bf16.gmra.mrb[0].mxu0 %v135
    %v199 = vpop.f32.mrb[0].mxu0
    %v200 = vadd.f32 %v53, %v199
    %v201 = vpop.f32.mrb[0].mxu0
    %v202 = vadd.f32 %v57, %v201
    %v203 = vpop.f32.mrb[0].mxu0
    %v204 = vadd.f32 %v53, %v203
    %v205 = vpop.f32.mrb[0].mxu0
    %v206 = vadd.f32 %v57, %v205
    %207 = vmatprep.mubr.bf16.mxu0 0
    %208 = vmatmul.mubr.bf16.gmra.mrb[0].mxu0 %v138
    %v209 = vpop.f32.mrb[0].mxu0
    %v210 = vadd.f32 %v53, %v209
    %v211 = vpop.f32.mrb[0].mxu0
    %v212 = vadd.f32 %v57, %v211
    %v213 = vpop.f32.mrb[0].mxu0
    %v214 = vadd.f32 %v53, %v213
    %v215 = vpop.f32.mrb[0].mxu0
    %v216 = vadd.f32 %v57, %v215
    %217 = vmatprep.mubr.bf16.mxu0 0
    %218 = vmatmul.mubr.bf16.gmra.mrb[0].mxu0 %v141
    %v219 = vpop.f32.mrb[0].mxu0
    %v220 = vadd.f32 %v53, %v219
    %v221 = vpop.f32.mrb[0].mxu0
    %v222 = vadd.f32 %v57, %v221
    %v223 = vpop.f32.mrb[0].mxu0
    %v224 = vadd.f32 %v53, %v223
    %v225 = vpop.f32.mrb[0].mxu0
    %v226 = vadd.f32 %v57, %v225
    %227 = vmatprep.mubr.bf16.mxu0 0
    %228 = vmatmul.mubr.bf16.gmra.mrb[0].mxu0 %v144
    %v229 = vpop.f32.mrb[0].mxu0
    %v230 = vadd.f32 %v53, %v229
    %v231 = vpop.f32.mrb[0].mxu0
    %v232 = vadd.f32 %v57, %v231
    %v233 = vpop.f32.mrb[0].mxu0
    %v234 = vadd.f32 %v53, %v233
    %v235 = vpop.f32.mrb[0].mxu0
    %v236 = vadd.f32 %v57, %v235
    %237 = vmatprep.mubr.bf16.mxu0 0
    %238 = vmatmul.mubr.bf16.gmra.mrb[0].mxu0 %v147
    %v239 = vpop.f32.mrb[0].mxu0
    %v240 = vadd.f32 %v53, %v239
    %v241 = vpop.f32.mrb[0].mxu0
    %v242 = vadd.f32 %v57, %v241
    %v243 = vpop.f32.mrb[0].mxu0
    %v244 = vadd.f32 %v53, %v243
    %v245 = vpop.f32.mrb[0].mxu0
    %v246 = vadd.f32 %v57, %v245
    %247 = vmatprep.mubr.bf16.mxu0 0
    %248 = vmatmul.mubr.bf16.gmra.mrb[0].mxu0 %v150
    %v249 = vpop.f32.mrb[0].mxu0
    %v250 = vadd.f32 %v53, %v249
    %v251 = vpop.f32.mrb[0].mxu0
    %v252 = vadd.f32 %v57, %v251
    %v253 = vpop.f32.mrb[0].mxu0
    %v254 = vadd.f32 %v53, %v253
    %v255 = vpop.f32.mrb[0].mxu0
    %v256 = vadd.f32 %v57, %v255
    %257 = vmatprep.mubr.bf16.mxu0 0
    %258 = vmatmul.mubr.bf16.gmra.mrb[0].mxu0 %v153
    %v259 = vpop.f32.mrb[0].mxu0
    %v260 = vadd.f32 %v53, %v259
    %v261 = vpop.f32.mrb[0].mxu0
    %v262 = vadd.f32 %v57, %v261
    %v263 = vpop.f32.mrb[0].mxu0
    %v264 = vadd.f32 %v53, %v263
    %v265 = vpop.f32.mrb[0].mxu0
    %v266 = vadd.f32 %v57, %v265
    %267 = vdwg.mxu0
    %268 = vmatprep.subr.bf16.mxu0 %v125
    %269 = vmatpush1.bf16.msra.mxu0 %v124
    %270 = vmatprep.subr.bf16.mxu0 0
    %271 = vmatpush1.bf16.msra.mxu0 0
    %272 = vmatprep.subr.bf16.mxu0 0
    %273 = vmatpush1.bf16.msra.mxu0 0
    %274 = vmatprep.subr.bf16.mxu0 0
    %275 = vmatpush1.bf16.msra.mxu0 0
    %276 = vmatprep.subr.bf16.mxu0 0
    %277 = vmatpush1.bf16.msra.mxu0 0
    %278 = vmatprep.subr.bf16.mxu0 0
    %279 = vmatpush1.bf16.msra.mxu0 0
    %280 = vmatprep.subr.bf16.mxu0 0
    %281 = vmatpush1.bf16.msra.mxu0 0
    %282 = vmatprep.subr.bf16.mxu0 0
    %283 = vmatpush1.bf16.msra.mxu0 0
    %284 = vmatprep.subr.bf16.mxu0 0
    %285 = vmatpush1.bf16.msra.mxu0 0
    %286 = vmatprep.subr.bf16.mxu0 0
    %287 = vmatpush1.bf16.msra.mxu0 0
    %288 = vmatprep.subr.bf16.mxu0 0
    %289 = vmatpush1.bf16.msra.mxu0 0
    %290 = vmatprep.subr.bf16.mxu0 0
    %291 = vmatpush1.bf16.msra.mxu0 0
    %292 = vmatprep.subr.bf16.mxu0 0
    %293 = vmatpush1.bf16.msra.mxu0 0
    %294 = vmatprep.subr.bf16.mxu0 0
    %295 = vmatpush1.bf16.msra.mxu0 0
    %296 = vmatprep.subr.bf16.mxu0 0
    %297 = vmatpush1.bf16.msra.mxu0 0
    %298 = vmatprep.subr.bf16.mxu0 0
    %299 = vmatpush1.bf16.msra.mxu0 0
    %300 = vmatprep.mubr.bf16.mxu0 0
    %301 = vmatmul.mubr.bf16.gmra.mrb[0].mxu0 %v132
    %v302 = vpop.f32.mrb[0].mxu0
    %v303 = vadd.f32 %v61, %v302
    %v304 = vpop.f32.mrb[0].mxu0
    %v305 = vadd.f32 %v65, %v304
    %v306 = vpop.f32.mrb[0].mxu0
    %v307 = vadd.f32 %v61, %v306
    %v308 = vpop.f32.mrb[0].mxu0
    %v309 = vadd.f32 %v65, %v308
    %310 = vmatprep.mubr.bf16.mxu0 0
    %311 = vmatmul.mubr.bf16.gmra.mrb[0].mxu0 %v135
    %v312 = vpop.f32.mrb[0].mxu0
    %v313 = vadd.f32 %v61, %v312
    %v314 = vpop.f32.mrb[0].mxu0
    %v315 = vadd.f32 %v65, %v314
    %v316 = vpop.f32.mrb[0].mxu0
    %v317 = vadd.f32 %v61, %v316
    %v318 = vpop.f32.mrb[0].mxu0
    %v319 = vadd.f32 %v65, %v318
    %320 = vmatprep.mubr.bf16.mxu0 0
    %321 = vmatmul.mubr.bf16.gmra.mrb[0].mxu0 %v138
    %v322 = vpop.f32.mrb[0].mxu0
    %v323 = vadd.f32 %v61, %v322
    %v324 = vpop.f32.mrb[0].mxu0
    %v325 = vadd.f32 %v65, %v324
    %v326 = vpop.f32.mrb[0].mxu0
    %v327 = vadd.f32 %v61, %v326
    %v328 = vpop.f32.mrb[0].mxu0
    %v329 = vadd.f32 %v65, %v328
    %330 = vmatprep.mubr.bf16.mxu0 0
    %331 = vmatmul.mubr.bf16.gmra.mrb[0].mxu0 %v141
    %v332 = vpop.f32.mrb[0].mxu0
    %v333 = vadd.f32 %v61, %v332
    %v334 = vpop.f32.mrb[0].mxu0
    %v335 = vadd.f32 %v65, %v334
    %v336 = vpop.f32.mrb[0].mxu0
    %v337 = vadd.f32 %v61, %v336
    %v338 = vpop.f32.mrb[0].mxu0
    %v339 = vadd.f32 %v65, %v338
    %340 = vmatprep.mubr.bf16.mxu0 0
    %341 = vmatmul.mubr.bf16.gmra.mrb[0].mxu0 %v144
    %v342 = vpop.f32.mrb[0].mxu0
    %v343 = vadd.f32 %v61, %v342
    %v344 = vpop.f32.mrb[0].mxu0
    %v345 = vadd.f32 %v65, %v344
    %v346 = vpop.f32.mrb[0].mxu0
    %v347 = vadd.f32 %v61, %v346
    %v348 = vpop.f32.mrb[0].mxu0
    %v349 = vadd.f32 %v65, %v348
    %350 = vmatprep.mubr.bf16.mxu0 0
    %351 = vmatmul.mubr.bf16.gmra.mrb[0].mxu0 %v147
    %v352 = vpop.f32.mrb[0].mxu0
    %v353 = vadd.f32 %v61, %v352
    %v354 = vpop.f32.mrb[0].mxu0
    %v355 = vadd.f32 %v65, %v354
    %v356 = vpop.f32.mrb[0].mxu0
    %v357 = vadd.f32 %v61, %v356
    %v358 = vpop.f32.mrb[0].mxu0
    %v359 = vadd.f32 %v65, %v358
    %360 = vmatprep.mubr.bf16.mxu0 0
    %361 = vmatmul.mubr.bf16.gmra.mrb[0].mxu0 %v150
    %v362 = vpop.f32.mrb[0].mxu0
    %v363 = vadd.f32 %v61, %v362
    %v364 = vpop.f32.mrb[0].mxu0
    %v365 = vadd.f32 %v65, %v364
    %v366 = vpop.f32.mrb[0].mxu0
    %v367 = vadd.f32 %v61, %v366
    %v368 = vpop.f32.mrb[0].mxu0
    %v369 = vadd.f32 %v65, %v368
    %370 = vmatprep.mubr.bf16.mxu0 0
    %371 = vmatmul.mubr.bf16.gmra.mrb[0].mxu0 %v153
    %v372 = vpop.f32.mrb[0].mxu0
    %v373 = vadd.f32 %v61, %v372
    %v374 = vpop.f32.mrb[0].mxu0
    %v375 = vadd.f32 %v65, %v374
    %v376 = vpop.f32.mrb[0].mxu0
    %v377 = vadd.f32 %v61, %v376
    %v378 = vpop.f32.mrb[0].mxu0
    %v379 = vadd.f32 %v65, %v378
    %380 = vdwg.mxu0
    %v381 = vmax.f32 %v190, 0.0
    %v382 = vmax.f32 %v192, 0.0
    %v383 = vmax.f32 %v303, 0.0
    %v384 = vmax.f32 %v305, 0.0
    %v385 = vmax.f32 %v194, 0.0
    %v386 = vmax.f32 %v196, 0.0
    %v387 = vmax.f32 %v307, 0.0
    %v388 = vmax.f32 %v309, 0.0
    %v389 = vmax.f32 %v200, 0.0
    %v390 = vmax.f32 %v202, 0.0
    %v391 = vmax.f32 %v313, 0.0
    %v392 = vmax.f32 %v315, 0.0
    %v393 = vmax.f32 %v204, 0.0
    %v394 = vmax.f32 %v206, 0.0
    %v395 = vmax.f32 %v317, 0.0
    %v396 = vmax.f32 %v319, 0.0
    %v397 = vmax.f32 %v210, 0.0
    %v398 = vmax.f32 %v212, 0.0
    %v399 = vmax.f32 %v323, 0.0
    %v400 = vmax.f32 %v325, 0.0
    %v401 = vmax.f32 %v214, 0.0
    %v402 = vmax.f32 %v216, 0.0
    %v403 = vmax.f32 %v327, 0.0
    %v404 = vmax.f32 %v329, 0.0
    %v405 = vmax.f32 %v220, 0.0
    %v406 = vmax.f32 %v222, 0.0
    %v407 = vmax.f32 %v333, 0.0
    %v408 = vmax.f32 %v335, 0.0
    %v409 = vmax.f32 %v224, 0.0
    %v410 = vmax.f32 %v226, 0.0
    %v411 = vmax.f32 %v337, 0.0
    %v412 = vmax.f32 %v339, 0.0
    %v413 = vmax.f32 %v230, 0.0
    %v414 = vmax.f32 %v232, 0.0
    %v415 = vmax.f32 %v343, 0.0
    %v416 = vmax.f32 %v345, 0.0
    %v417 = vmax.f32 %v234, 0.0
    %v418 = vmax.f32 %v236, 0.0
    %v419 = vmax.f32 %v347, 0.0
    %v420 = vmax.f32 %v349, 0.0
    %v421 = vmax.f32 %v240, 0.0
    %v422 = vmax.f32 %v242, 0.0
    %v423 = vmax.f32 %v353, 0.0
    %v424 = vmax.f32 %v355, 0.0
    %v425 = vmax.f32 %v244, 0.0
    %v426 = vmax.f32 %v246, 0.0
    %v427 = vmax.f32 %v357, 0.0
    %v428 = vmax.f32 %v359, 0.0
    %v429 = vmax.f32 %v250, 0.0
    %v430 = vmax.f32 %v252, 0.0
    %v431 = vmax.f32 %v363, 0.0
    %v432 = vmax.f32 %v365, 0.0
    %v433 = vmax.f32 %v254, 0.0
    %v434 = vmax.f32 %v256, 0.0
    %v435 = vmax.f32 %v367, 0.0
    %v436 = vmax.f32 %v369, 0.0
    %v437 = vmax.f32 %v260, 0.0
    %v438 = vmax.f32 %v262, 0.0
    %v439 = vmax.f32 %v373, 0.0
    %v440 = vmax.f32 %v375, 0.0
    %v441 = vmax.f32 %v264, 0.0
    %v442 = vmax.f32 %v266, 0.0
    %v443 = vmax.f32 %v377, 0.0
    %v444 = vmax.f32 %v379, 0.0
    %v445 = vpack.c.bf16 %v385, %v381
    %v446 = vpack.c.bf16 %v386, %v382
    %v447 = vpack.c.bf16 %v387, %v383
    %v448 = vpack.c.bf16 %v388, %v384
    %v449 = vpack.c.bf16 %v393, %v389
    %v450 = vpack.c.bf16 %v394, %v390
    %v451 = vpack.c.bf16 %v395, %v391
    %v452 = vpack.c.bf16 %v396, %v392
    %v453 = vpack.c.bf16 %v401, %v397
    %v454 = vpack.c.bf16 %v402, %v398
    %v455 = vpack.c.bf16 %v403, %v399
    %v456 = vpack.c.bf16 %v404, %v400
    %v457 = vpack.c.bf16 %v409, %v405
    %v458 = vpack.c.bf16 %v410, %v406
    %v459 = vpack.c.bf16 %v411, %v407
    %v460 = vpack.c.bf16 %v412, %v408
    %v461 = vpack.c.bf16 %v417, %v413
    %v462 = vpack.c.bf16 %v418, %v414
    %v463 = vpack.c.bf16 %v419, %v415
    %v464 = vpack.c.bf16 %v420, %v416
    %v465 = vpack.c.bf16 %v425, %v421
    %v466 = vpack.c.bf16 %v426, %v422
    %v467 = vpack.c.bf16 %v427, %v423
    %v468 = vpack.c.bf16 %v428, %v424
    %v469 = vpack.c.bf16 %v433, %v429
    %v470 = vpack.c.bf16 %v434, %v430
    %v471 = vpack.c.bf16 %v435, %v431
    %v472 = vpack.c.bf16 %v436, %v432
    %v473 = vpack.c.bf16 %v441, %v437
    %v474 = vpack.c.bf16 %v442, %v438
    %v475 = vpack.c.bf16 %v443, %v439
    %v476 = vpack.c.bf16 %v444, %v440
    %v477 = vld [vmem:[%s3] sm:$0xff]
    %v478 = vld [vmem:[%s3 + $0x8] sm:$0xff]
    %v479 = vld [vmem:[%s3 + $0x10] sm:$0xff]
    %v480 = vld [vmem:[%s3 + $0x18] sm:$0xff]
    %v481 = vld [vmem:[%s3 + $0x20] sm:$0xff]
    %v482 = vld [vmem:[%s3 + $0x28] sm:$0xff]
    %v483 = vld [vmem:[%s3 + $0x30] sm:$0xff]
    %v484 = vld [vmem:[%s3 + $0x38] sm:$0xff]
    %v485 = vld [vmem:[%s3 + $0x40] sm:$0xff]
    %v486 = vld [vmem:[%s3 + $0x48] sm:$0xff]
    %v487 = vld [vmem:[%s3 + $0x50] sm:$0xff]
    %v488 = vld [vmem:[%s3 + $0x58] sm:$0xff]
    %v489 = vld [vmem:[%s3 + $0x60] sm:$0xff]
    %v490 = vld [vmem:[%s3 + $0x68] sm:$0xff]
    %v491 = vld [vmem:[%s3 + $0x70] sm:$0xff]
    %v492 = vld [vmem:[%s3 + $0x78] sm:$0xff]
    %v493 = vld [vmem:[%s3 + $0x80] sm:$0xff]
    %v494 = vld [vmem:[%s3 + $0x88] sm:$0xff]
    %v495 = vld [vmem:[%s3 + $0x90] sm:$0xff]
    %v496 = vld [vmem:[%s3 + $0x98] sm:$0xff]
    %v497 = vld [vmem:[%s3 + $0xa0] sm:$0xff]
    %v498 = vld [vmem:[%s3 + $0xa8] sm:$0xff]
    %v499 = vld [vmem:[%s3 + $0xb0] sm:$0xff]
    %v500 = vld [vmem:[%s3 + $0xb8] sm:$0xff]
    %v501 = vld [vmem:[%s3 + $0xc0] sm:$0xff]
    %v502 = vld [vmem:[%s3 + $0xc8] sm:$0xff]
    %v503 = vld [vmem:[%s3 + $0xd0] sm:$0xff]
    %v504 = vld [vmem:[%s3 + $0xd8] sm:$0xff]
    %v505 = vld [vmem:[%s3 + $0xe0] sm:$0xff]
    %v506 = vld [vmem:[%s3 + $0xe8] sm:$0xff]
    %v507 = vld [vmem:[%s3 + $0xf0] sm:$0xff]
    %v508 = vld [vmem:[%s3 + $0xf8] sm:$0xff]
    %v509 = vld [vmem:[%s3 + $0x100] sm:$0xff]
    %v510 = vld [vmem:[%s3 + $0x108] sm:$0xff]
    %v511 = vld [vmem:[%s3 + $0x110] sm:$0xff]
    %v512 = vld [vmem:[%s3 + $0x118] sm:$0xff]
    %v513 = vld [vmem:[%s3 + $0x120] sm:$0xff]
    %v514 = vld [vmem:[%s3 + $0x128] sm:$0xff]
    %v515 = vld [vmem:[%s3 + $0x130] sm:$0xff]
    %v516 = vld [vmem:[%s3 + $0x138] sm:$0xff]
    %v517 = vld [vmem:[%s3 + $0x140] sm:$0xff]
    %v518 = vld [vmem:[%s3 + $0x148] sm:$0xff]
    %v519 = vld [vmem:[%s3 + $0x150] sm:$0xff]
    %v520 = vld [vmem:[%s3 + $0x158] sm:$0xff]
    %v521 = vld [vmem:[%s3 + $0x160] sm:$0xff]
    %v522 = vld [vmem:[%s3 + $0x168] sm:$0xff]
    %v523 = vld [vmem:[%s3 + $0x170] sm:$0xff]
    %v524 = vld [vmem:[%s3 + $0x178] sm:$0xff]
    %v525 = vld [vmem:[%s3 + $0x180] sm:$0xff]
    %v526 = vld [vmem:[%s3 + $0x188] sm:$0xff]
    %v527 = vld [vmem:[%s3 + $0x190] sm:$0xff]
    %v528 = vld [vmem:[%s3 + $0x198] sm:$0xff]
    %v529 = vld [vmem:[%s3 + $0x1a0] sm:$0xff]
    %v530 = vld [vmem:[%s3 + $0x1a8] sm:$0xff]
    %v531 = vld [vmem:[%s3 + $0x1b0] sm:$0xff]
    %v532 = vld [vmem:[%s3 + $0x1b8] sm:$0xff]
    %v533 = vld [vmem:[%s3 + $0x1c0] sm:$0xff]
    %v534 = vld [vmem:[%s3 + $0x1c8] sm:$0xff]
    %v535 = vld [vmem:[%s3 + $0x1d0] sm:$0xff]
    %v536 = vld [vmem:[%s3 + $0x1d8] sm:$0xff]
    %v537 = vld [vmem:[%s3 + $0x1e0] sm:$0xff]
    %v538 = vld [vmem:[%s3 + $0x1e8] sm:$0xff]
    %v539 = vld [vmem:[%s3 + $0x1f0] sm:$0xff]
    %v540 = vld [vmem:[%s3 + $0x1f8] sm:$0xff]
    %v541 = vld [vmem:[%s3 + $0x200] sm:$0xff]
    %v542 = vld [vmem:[%s3 + $0x208] sm:$0xff]
    %v543 = vld [vmem:[%s3 + $0x210] sm:$0xff]
    %v544 = vld [vmem:[%s3 + $0x218] sm:$0xff]
    %v545 = vld [vmem:[%s3 + $0x220] sm:$0xff]
    %v546 = vld [vmem:[%s3 + $0x228] sm:$0xff]
    %v547 = vld [vmem:[%s3 + $0x230] sm:$0xff]
    %v548 = vld [vmem:[%s3 + $0x238] sm:$0xff]
    %v549 = vld [vmem:[%s3 + $0x240] sm:$0xff]
    %v550 = vld [vmem:[%s3 + $0x248] sm:$0xff]
    %v551 = vld [vmem:[%s3 + $0x250] sm:$0xff]
    %v552 = vld [vmem:[%s3 + $0x258] sm:$0xff]
    %v553 = vld [vmem:[%s3 + $0x260] sm:$0xff]
    %v554 = vld [vmem:[%s3 + $0x268] sm:$0xff]
    %v555 = vld [vmem:[%s3 + $0x270] sm:$0xff]
    %v556 = vld [vmem:[%s3 + $0x278] sm:$0xff]
    %v557 = vld [vmem:[%s3 + $0x280] sm:$0xff]
    %v558 = vld [vmem:[%s3 + $0x288] sm:$0xff]
    %v559 = vld [vmem:[%s3 + $0x290] sm:$0xff]
    %v560 = vld [vmem:[%s3 + $0x298] sm:$0xff]
    %v561 = vld [vmem:[%s3 + $0x2a0] sm:$0xff]
    %v562 = vld [vmem:[%s3 + $0x2a8] sm:$0xff]
    %v563 = vld [vmem:[%s3 + $0x2b0] sm:$0xff]
    %v564 = vld [vmem:[%s3 + $0x2b8] sm:$0xff]
    %v565 = vld [vmem:[%s3 + $0x2c0] sm:$0xff]
    %v566 = vld [vmem:[%s3 + $0x2c8] sm:$0xff]
    %v567 = vld [vmem:[%s3 + $0x2d0] sm:$0xff]
    %v568 = vld [vmem:[%s3 + $0x2d8] sm:$0xff]
    %v569 = vld [vmem:[%s3 + $0x2e0] sm:$0xff]
    %v570 = vld [vmem:[%s3 + $0x2e8] sm:$0xff]
    %v571 = vld [vmem:[%s3 + $0x2f0] sm:$0xff]
    %v572 = vld [vmem:[%s3 + $0x2f8] sm:$0xff]
    %v573 = vld [vmem:[%s3 + $0x300] sm:$0xff]
    %v574 = vld [vmem:[%s3 + $0x308] sm:$0xff]
    %v575 = vld [vmem:[%s3 + $0x310] sm:$0xff]
    %v576 = vld [vmem:[%s3 + $0x318] sm:$0xff]
    %v577 = vld [vmem:[%s3 + $0x320] sm:$0xff]
    %v578 = vld [vmem:[%s3 + $0x328] sm:$0xff]
    %v579 = vld [vmem:[%s3 + $0x330] sm:$0xff]
    %v580 = vld [vmem:[%s3 + $0x338] sm:$0xff]
    %v581 = vld [vmem:[%s3 + $0x340] sm:$0xff]
    %v582 = vld [vmem:[%s3 + $0x348] sm:$0xff]
    %v583 = vld [vmem:[%s3 + $0x350] sm:$0xff]
    %v584 = vld [vmem:[%s3 + $0x358] sm:$0xff]
    %v585 = vld [vmem:[%s3 + $0x360] sm:$0xff]
    %v586 = vld [vmem:[%s3 + $0x368] sm:$0xff]
    %v587 = vld [vmem:[%s3 + $0x370] sm:$0xff]
    %v588 = vld [vmem:[%s3 + $0x378] sm:$0xff]
    %v589 = vld [vmem:[%s3 + $0x380] sm:$0xff]
    %v590 = vld [vmem:[%s3 + $0x388] sm:$0xff]
    %v591 = vld [vmem:[%s3 + $0x390] sm:$0xff]
    %v592 = vld [vmem:[%s3 + $0x398] sm:$0xff]
    %v593 = vld [vmem:[%s3 + $0x3a0] sm:$0xff]
    %v594 = vld [vmem:[%s3 + $0x3a8] sm:$0xff]
    %v595 = vld [vmem:[%s3 + $0x3b0] sm:$0xff]
    %v596 = vld [vmem:[%s3 + $0x3b8] sm:$0xff]
    %v597 = vld [vmem:[%s3 + $0x3c0] sm:$0xff]
    %v598 = vld [vmem:[%s3 + $0x3c8] sm:$0xff]
    %v599 = vld [vmem:[%s3 + $0x3d0] sm:$0xff]
    %v600 = vld [vmem:[%s3 + $0x3d8] sm:$0xff]
    %v601 = vld [vmem:[%s3 + $0x3e0] sm:$0xff]
    %v602 = vld [vmem:[%s3 + $0x3e8] sm:$0xff]
    %v603 = vld [vmem:[%s3 + $0x3f0] sm:$0xff]
    %v604 = vld [vmem:[%s3 + $0x3f8] sm:$0xff]
    %v605 = vld [vmem:[%s4] sm:$0xf]
    %v607 = vlaneseq
    %v608 = vshrl.u32 %v607, 7
    %v609 = vsub.s32 0, %v608
    %v610 = vrot.slane %v605, %v609
    %v611 = vlaneseq
    %v612 = vshrl.u32 %v611, 7
    %v613 = vsub.s32 1, %v612
    %v614 = vrot.slane %v605, %v613
    %v615 = vlaneseq
    %v616 = vshrl.u32 %v615, 7
    %v617 = vsub.s32 2, %v616
    %v618 = vrot.slane %v605, %v617
    %v619 = vlaneseq
    %v620 = vshrl.u32 %v619, 7
    %v621 = vsub.s32 3, %v620
    %v622 = vrot.slane %v605, %v621
    %v755 = vunpack.c.l.b16 %v477
    %v756 = vunpack.c.h.b16 %v477
    %v757 = vunpack.c.l.b16 %v478
    %v758 = vunpack.c.h.b16 %v478
    %v759 = vunpack.c.l.b16 %v479
    %v760 = vunpack.c.h.b16 %v479
    %v761 = vunpack.c.l.b16 %v480
    %v762 = vunpack.c.h.b16 %v480
    %v763 = vunpack.c.l.b16 %v481
    %v764 = vunpack.c.h.b16 %v481
    %v765 = vunpack.c.l.b16 %v482
    %v766 = vunpack.c.h.b16 %v482
    %v767 = vunpack.c.l.b16 %v483
    %v768 = vunpack.c.h.b16 %v483
    %v769 = vunpack.c.l.b16 %v484
    %v770 = vunpack.c.h.b16 %v484
    %v771 = vunpack.c.l.b16 %v485
    %v772 = vunpack.c.h.b16 %v485
    %v773 = vunpack.c.l.b16 %v486
    %v774 = vunpack.c.h.b16 %v486
    %v775 = vunpack.c.l.b16 %v487
    %v776 = vunpack.c.h.b16 %v487
    %v777 = vunpack.c.l.b16 %v488
    %v778 = vunpack.c.h.b16 %v488
    %v779 = vunpack.c.l.b16 %v489
    %v780 = vunpack.c.h.b16 %v489
    %v781 = vunpack.c.l.b16 %v490
    %v782 = vunpack.c.h.b16 %v490
    %v783 = vunpack.c.l.b16 %v491
    %v784 = vunpack.c.h.b16 %v491
    %v785 = vunpack.c.l.b16 %v492
    %v786 = vunpack.c.h.b16 %v492
    %v787 = vunpack.c.l.b16 %v493
    %v788 = vunpack.c.h.b16 %v493
    %v789 = vunpack.c.l.b16 %v494
    %v790 = vunpack.c.h.b16 %v494
    %v791 = vunpack.c.l.b16 %v495
    %v792 = vunpack.c.h.b16 %v495
    %v793 = vunpack.c.l.b16 %v496
    %v794 = vunpack.c.h.b16 %v496
    %v795 = vunpack.c.l.b16 %v497
    %v796 = vunpack.c.h.b16 %v497
    %v797 = vunpack.c.l.b16 %v498
    %v798 = vunpack.c.h.b16 %v498
    %v799 = vunpack.c.l.b16 %v499
    %v800 = vunpack.c.h.b16 %v499
    %v801 = vunpack.c.l.b16 %v500
    %v802 = vunpack.c.h.b16 %v500
    %v803 = vunpack.c.l.b16 %v501
    %v804 = vunpack.c.h.b16 %v501
    %v805 = vunpack.c.l.b16 %v502
    %v806 = vunpack.c.h.b16 %v502
    %v807 = vunpack.c.l.b16 %v503
    %v808 = vunpack.c.h.b16 %v503
    %v809 = vunpack.c.l.b16 %v504
    %v810 = vunpack.c.h.b16 %v504
    %v811 = vunpack.c.l.b16 %v505
    %v812 = vunpack.c.h.b16 %v505
    %v813 = vunpack.c.l.b16 %v506
    %v814 = vunpack.c.h.b16 %v506
    %v815 = vunpack.c.l.b16 %v507
    %v816 = vunpack.c.h.b16 %v507
    %v817 = vunpack.c.l.b16 %v508
    %v818 = vunpack.c.h.b16 %v508
    %v819 = vunpack.c.l.b16 %v509
    %v820 = vunpack.c.h.b16 %v509
    %v821 = vunpack.c.l.b16 %v510
    %v822 = vunpack.c.h.b16 %v510
    %v823 = vunpack.c.l.b16 %v511
    %v824 = vunpack.c.h.b16 %v511
    %v825 = vunpack.c.l.b16 %v512
    %v826 = vunpack.c.h.b16 %v512
    %v827 = vunpack.c.l.b16 %v513
    %v828 = vunpack.c.h.b16 %v513
    %v829 = vunpack.c.l.b16 %v514
    %v830 = vunpack.c.h.b16 %v514
    %v831 = vunpack.c.l.b16 %v515
    %v832 = vunpack.c.h.b16 %v515
    %v833 = vunpack.c.l.b16 %v516
    %v834 = vunpack.c.h.b16 %v516
    %v835 = vunpack.c.l.b16 %v517
    %v836 = vunpack.c.h.b16 %v517
    %v837 = vunpack.c.l.b16 %v518
    %v838 = vunpack.c.h.b16 %v518
    %v839 = vunpack.c.l.b16 %v519
    %v840 = vunpack.c.h.b16 %v519
    %v841 = vunpack.c.l.b16 %v520
    %v842 = vunpack.c.h.b16 %v520
    %v843 = vunpack.c.l.b16 %v521
    %v844 = vunpack.c.h.b16 %v521
    %v845 = vunpack.c.l.b16 %v522
    %v846 = vunpack.c.h.b16 %v522
    %v847 = vunpack.c.l.b16 %v523
    %v848 = vunpack.c.h.b16 %v523
    %v849 = vunpack.c.l.b16 %v524
    %v850 = vunpack.c.h.b16 %v524
    %v851 = vunpack.c.l.b16 %v525
    %v852 = vunpack.c.h.b16 %v525
    %v853 = vunpack.c.l.b16 %v526
    %v854 = vunpack.c.h.b16 %v526
    %v855 = vunpack.c.l.b16 %v527
    %v856 = vunpack.c.h.b16 %v527
    %v857 = vunpack.c.l.b16 %v528
    %v858 = vunpack.c.h.b16 %v528
    %v859 = vunpack.c.l.b16 %v529
    %v860 = vunpack.c.h.b16 %v529
    %v861 = vunpack.c.l.b16 %v530
    %v862 = vunpack.c.h.b16 %v530
    %v863 = vunpack.c.l.b16 %v531
    %v864 = vunpack.c.h.b16 %v531
    %v865 = vunpack.c.l.b16 %v532
    %v866 = vunpack.c.h.b16 %v532
    %v867 = vunpack.c.l.b16 %v533
    %v868 = vunpack.c.h.b16 %v533
    %v869 = vunpack.c.l.b16 %v534
    %v870 = vunpack.c.h.b16 %v534
    %v871 = vunpack.c.l.b16 %v535
    %v872 = vunpack.c.h.b16 %v535
    %v873 = vunpack.c.l.b16 %v536
    %v874 = vunpack.c.h.b16 %v536
    %v875 = vunpack.c.l.b16 %v537
    %v876 = vunpack.c.h.b16 %v537
    %v877 = vunpack.c.l.b16 %v538
    %v878 = vunpack.c.h.b16 %v538
    %v879 = vunpack.c.l.b16 %v539
    %v880 = vunpack.c.h.b16 %v539
    %v881 = vunpack.c.l.b16 %v540
    %v882 = vunpack.c.h.b16 %v540
    %v883 = vunpack.c.l.b16 %v541
    %v884 = vunpack.c.h.b16 %v541
    %v885 = vunpack.c.l.b16 %v542
    %v886 = vunpack.c.h.b16 %v542
    %v887 = vunpack.c.l.b16 %v543
    %v888 = vunpack.c.h.b16 %v543
    %v889 = vunpack.c.l.b16 %v544
    %v890 = vunpack.c.h.b16 %v544
    %v891 = vunpack.c.l.b16 %v545
    %v892 = vunpack.c.h.b16 %v545
    %v893 = vunpack.c.l.b16 %v546
    %v894 = vunpack.c.h.b16 %v546
    %v895 = vunpack.c.l.b16 %v547
    %v896 = vunpack.c.h.b16 %v547
    %v897 = vunpack.c.l.b16 %v548
    %v898 = vunpack.c.h.b16 %v548
    %v899 = vunpack.c.l.b16 %v549
    %v900 = vunpack.c.h.b16 %v549
    %v901 = vunpack.c.l.b16 %v550
    %v902 = vunpack.c.h.b16 %v550
    %v903 = vunpack.c.l.b16 %v551
    %v904 = vunpack.c.h.b16 %v551
    %v905 = vunpack.c.l.b16 %v552
    %v906 = vunpack.c.h.b16 %v552
    %v907 = vunpack.c.l.b16 %v553
    %v908 = vunpack.c.h.b16 %v553
    %v909 = vunpack.c.l.b16 %v554
    %v910 = vunpack.c.h.b16 %v554
    %v911 = vunpack.c.l.b16 %v555
    %v912 = vunpack.c.h.b16 %v555
    %v913 = vunpack.c.l.b16 %v556
    %v914 = vunpack.c.h.b16 %v556
    %v915 = vunpack.c.l.b16 %v557
    %v916 = vunpack.c.h.b16 %v557
    %v917 = vunpack.c.l.b16 %v558
    %v918 = vunpack.c.h.b16 %v558
    %v919 = vunpack.c.l.b16 %v559
    %v920 = vunpack.c.h.b16 %v559
    %v921 = vunpack.c.l.b16 %v560
    %v922 = vunpack.c.h.b16 %v560
    %v923 = vunpack.c.l.b16 %v561
    %v924 = vunpack.c.h.b16 %v561
    %v925 = vunpack.c.l.b16 %v562
    %v926 = vunpack.c.h.b16 %v562
    %v927 = vunpack.c.l.b16 %v563
    %v928 = vunpack.c.h.b16 %v563
    %v929 = vunpack.c.l.b16 %v564
    %v930 = vunpack.c.h.b16 %v564
    %v931 = vunpack.c.l.b16 %v565
    %v932 = vunpack.c.h.b16 %v565
    %v933 = vunpack.c.l.b16 %v566
    %v934 = vunpack.c.h.b16 %v566
    %v935 = vunpack.c.l.b16 %v567
    %v936 = vunpack.c.h.b16 %v567
    %v937 = vunpack.c.l.b16 %v568
    %v938 = vunpack.c.h.b16 %v568
    %v939 = vunpack.c.l.b16 %v569
    %v940 = vunpack.c.h.b16 %v569
    %v941 = vunpack.c.l.b16 %v570
    %v942 = vunpack.c.h.b16 %v570
    %v943 = vunpack.c.l.b16 %v571
    %v944 = vunpack.c.h.b16 %v571
    %v945 = vunpack.c.l.b16 %v572
    %v946 = vunpack.c.h.b16 %v572
    %v947 = vunpack.c.l.b16 %v573
    %v948 = vunpack.c.h.b16 %v573
    %v949 = vunpack.c.l.b16 %v574
    %v950 = vunpack.c.h.b16 %v574
    %v951 = vunpack.c.l.b16 %v575
    %v952 = vunpack.c.h.b16 %v575
    %v953 = vunpack.c.l.b16 %v576
    %v954 = vunpack.c.h.b16 %v576
    %v955 = vunpack.c.l.b16 %v577
    %v956 = vunpack.c.h.b16 %v577
    %v957 = vunpack.c.l.b16 %v578
    %v958 = vunpack.c.h.b16 %v578
    %v959 = vunpack.c.l.b16 %v579
    %v960 = vunpack.c.h.b16 %v579
    %v961 = vunpack.c.l.b16 %v580
    %v962 = vunpack.c.h.b16 %v580
    %v963 = vunpack.c.l.b16 %v581
    %v964 = vunpack.c.h.b16 %v581
    %v965 = vunpack.c.l.b16 %v582
    %v966 = vunpack.c.h.b16 %v582
    %v967 = vunpack.c.l.b16 %v583
    %v968 = vunpack.c.h.b16 %v583
    %v969 = vunpack.c.l.b16 %v584
    %v970 = vunpack.c.h.b16 %v584
    %v971 = vunpack.c.l.b16 %v585
    %v972 = vunpack.c.h.b16 %v585
    %v973 = vunpack.c.l.b16 %v586
    %v974 = vunpack.c.h.b16 %v586
    %v975 = vunpack.c.l.b16 %v587
    %v976 = vunpack.c.h.b16 %v587
    %v977 = vunpack.c.l.b16 %v588
    %v978 = vunpack.c.h.b16 %v588
    %v979 = vunpack.c.l.b16 %v589
    %v980 = vunpack.c.h.b16 %v589
    %v981 = vunpack.c.l.b16 %v590
    %v982 = vunpack.c.h.b16 %v590
    %v983 = vunpack.c.l.b16 %v591
    %v984 = vunpack.c.h.b16 %v591
    %v985 = vunpack.c.l.b16 %v592
    %v986 = vunpack.c.h.b16 %v592
    %v987 = vunpack.c.l.b16 %v593
    %v988 = vunpack.c.h.b16 %v593
    %v989 = vunpack.c.l.b16 %v594
    %v990 = vunpack.c.h.b16 %v594
    %v991 = vunpack.c.l.b16 %v595
    %v992 = vunpack.c.h.b16 %v595
    %v993 = vunpack.c.l.b16 %v596
    %v994 = vunpack.c.h.b16 %v596
    %v995 = vunpack.c.l.b16 %v597
    %v996 = vunpack.c.h.b16 %v597
    %v997 = vunpack.c.l.b16 %v598
    %v998 = vunpack.c.h.b16 %v598
    %v999 = vunpack.c.l.b16 %v599
    %v1000 = vunpack.c.h.b16 %v599
    %v1001 = vunpack.c.l.b16 %v600
    %v1002 = vunpack.c.h.b16 %v600
    %v1003 = vunpack.c.l.b16 %v601
    %v1004 = vunpack.c.h.b16 %v601
    %v1005 = vunpack.c.l.b16 %v602
    %v1006 = vunpack.c.h.b16 %v602
    %v1007 = vunpack.c.l.b16 %v603
    %v1008 = vunpack.c.h.b16 %v603
    %v1009 = vunpack.c.l.b16 %v604
    %v1010 = vunpack.c.h.b16 %v604
    %v1011 = vpack.c.b16 %v759, %v755
    %v1012 = vpack.c.b16 %v760, %v756
    %v1013 = vpack.c.b16 %v761, %v757
    %v1014 = vpack.c.b16 %v762, %v758
    %v1015 = vpack.c.b16 %v767, %v763
    %v1016 = vpack.c.b16 %v768, %v764
    %v1017 = vpack.c.b16 %v769, %v765
    %v1018 = vpack.c.b16 %v770, %v766
    %v1019 = vpack.c.b16 %v775, %v771
    %v1020 = vpack.c.b16 %v776, %v772
    %v1021 = vpack.c.b16 %v777, %v773
    %v1022 = vpack.c.b16 %v778, %v774
    %v1023 = vpack.c.b16 %v783, %v779
    %v1024 = vpack.c.b16 %v784, %v780
    %v1025 = vpack.c.b16 %v785, %v781
    %v1026 = vpack.c.b16 %v786, %v782
    %v1027 = vpack.c.b16 %v791, %v787
    %v1028 = vpack.c.b16 %v792, %v788
    %v1029 = vpack.c.b16 %v793, %v789
    %v1030 = vpack.c.b16 %v794, %v790
    %v1031 = vpack.c.b16 %v799, %v795
    %v1032 = vpack.c.b16 %v800, %v796
    %v1033 = vpack.c.b16 %v801, %v797
    %v1034 = vpack.c.b16 %v802, %v798
    %v1035 = vpack.c.b16 %v807, %v803
    %v1036 = vpack.c.b16 %v808, %v804
    %v1037 = vpack.c.b16 %v809, %v805
    %v1038 = vpack.c.b16 %v810, %v806
    %v1039 = vpack.c.b16 %v815, %v811
    %v1040 = vpack.c.b16 %v816, %v812
    %v1041 = vpack.c.b16 %v817, %v813
    %v1042 = vpack.c.b16 %v818, %v814
    %v1043 = vpack.c.b16 %v823, %v819
    %v1044 = vpack.c.b16 %v824, %v820
    %v1045 = vpack.c.b16 %v825, %v821
    %v1046 = vpack.c.b16 %v826, %v822
    %v1047 = vpack.c.b16 %v831, %v827
    %v1048 = vpack.c.b16 %v832, %v828
    %v1049 = vpack.c.b16 %v833, %v829
    %v1050 = vpack.c.b16 %v834, %v830
    %v1051 = vpack.c.b16 %v839, %v835
    %v1052 = vpack.c.b16 %v840, %v836
    %v1053 = vpack.c.b16 %v841, %v837
    %v1054 = vpack.c.b16 %v842, %v838
    %v1055 = vpack.c.b16 %v847, %v843
    %v1056 = vpack.c.b16 %v848, %v844
    %v1057 = vpack.c.b16 %v849, %v845
    %v1058 = vpack.c.b16 %v850, %v846
    %v1059 = vpack.c.b16 %v855, %v851
    %v1060 = vpack.c.b16 %v856, %v852
    %v1061 = vpack.c.b16 %v857, %v853
    %v1062 = vpack.c.b16 %v858, %v854
    %v1063 = vpack.c.b16 %v863, %v859
    %v1064 = vpack.c.b16 %v864, %v860
    %v1065 = vpack.c.b16 %v865, %v861
    %v1066 = vpack.c.b16 %v866, %v862
    %v1067 = vpack.c.b16 %v871, %v867
    %v1068 = vpack.c.b16 %v872, %v868
    %v1069 = vpack.c.b16 %v873, %v869
    %v1070 = vpack.c.b16 %v874, %v870
    %v1071 = vpack.c.b16 %v879, %v875
    %v1072 = vpack.c.b16 %v880, %v876
    %v1073 = vpack.c.b16 %v881, %v877
    %v1074 = vpack.c.b16 %v882, %v878
    %v1075 = vpack.c.b16 %v887, %v883
    %v1076 = vpack.c.b16 %v888, %v884
    %v1077 = vpack.c.b16 %v889, %v885
    %v1078 = vpack.c.b16 %v890, %v886
    %v1079 = vpack.c.b16 %v895, %v891
    %v1080 = vpack.c.b16 %v896, %v892
    %v1081 = vpack.c.b16 %v897, %v893
    %v1082 = vpack.c.b16 %v898, %v894
    %v1083 = vpack.c.b16 %v903, %v899
    %v1084 = vpack.c.b16 %v904, %v900
    %v1085 = vpack.c.b16 %v905, %v901
    %v1086 = vpack.c.b16 %v906, %v902
    %v1087 = vpack.c.b16 %v911, %v907
    %v1088 = vpack.c.b16 %v912, %v908
    %v1089 = vpack.c.b16 %v913, %v909
    %v1090 = vpack.c.b16 %v914, %v910
    %v1091 = vpack.c.b16 %v919, %v915
    %v1092 = vpack.c.b16 %v920, %v916
    %v1093 = vpack.c.b16 %v921, %v917
    %v1094 = vpack.c.b16 %v922, %v918
    %v1095 = vpack.c.b16 %v927, %v923
    %v1096 = vpack.c.b16 %v928, %v924
    %v1097 = vpack.c.b16 %v929, %v925
    %v1098 = vpack.c.b16 %v930, %v926
    %v1099 = vpack.c.b16 %v935, %v931
    %v1100 = vpack.c.b16 %v936, %v932
    %v1101 = vpack.c.b16 %v937, %v933
    %v1102 = vpack.c.b16 %v938, %v934
    %v1103 = vpack.c.b16 %v943, %v939
    %v1104 = vpack.c.b16 %v944, %v940
    %v1105 = vpack.c.b16 %v945, %v941
    %v1106 = vpack.c.b16 %v946, %v942
    %v1107 = vpack.c.b16 %v951, %v947
    %v1108 = vpack.c.b16 %v952, %v948
    %v1109 = vpack.c.b16 %v953, %v949
    %v1110 = vpack.c.b16 %v954, %v950
    %v1111 = vpack.c.b16 %v959, %v955
    %v1112 = vpack.c.b16 %v960, %v956
    %v1113 = vpack.c.b16 %v961, %v957
    %v1114 = vpack.c.b16 %v962, %v958
    %v1115 = vpack.c.b16 %v967, %v963
    %v1116 = vpack.c.b16 %v968, %v964
    %v1117 = vpack.c.b16 %v969, %v965
    %v1118 = vpack.c.b16 %v970, %v966
    %v1119 = vpack.c.b16 %v975, %v971
    %v1120 = vpack.c.b16 %v976, %v972
    %v1121 = vpack.c.b16 %v977, %v973
    %v1122 = vpack.c.b16 %v978, %v974
    %v1123 = vpack.c.b16 %v983, %v979
    %v1124 = vpack.c.b16 %v984, %v980
    %v1125 = vpack.c.b16 %v985, %v981
    %v1126 = vpack.c.b16 %v986, %v982
    %v1127 = vpack.c.b16 %v991, %v987
    %v1128 = vpack.c.b16 %v992, %v988
    %v1129 = vpack.c.b16 %v993, %v989
    %v1130 = vpack.c.b16 %v994, %v990
    %v1131 = vpack.c.b16 %v999, %v995
    %v1132 = vpack.c.b16 %v1000, %v996
    %v1133 = vpack.c.b16 %v1001, %v997
    %v1134 = vpack.c.b16 %v1002, %v998
    %v1135 = vpack.c.b16 %v1007, %v1003
    %v1136 = vpack.c.b16 %v1008, %v1004
    %v1137 = vpack.c.b16 %v1009, %v1005
    %v1138 = vpack.c.b16 %v1010, %v1006
    %1267 = vmatprep.subr.bf16.mxu0 %v1012
    %1268 = vmatpush1.bf16.msra.mxu0 %v1011
    %1269 = vmatprep.subr.bf16.mxu0 %v1016
    %1270 = vmatpush1.bf16.msra.mxu0 %v1015
    %1271 = vmatprep.subr.bf16.mxu0 %v1020
    %1272 = vmatpush1.bf16.msra.mxu0 %v1019
    %1273 = vmatprep.subr.bf16.mxu0 %v1024
    %1274 = vmatpush1.bf16.msra.mxu0 %v1023
    %1275 = vmatprep.subr.bf16.mxu0 %v1028
    %1276 = vmatpush1.bf16.msra.mxu0 %v1027
    %1277 = vmatprep.subr.bf16.mxu0 %v1032
    %1278 = vmatpush1.bf16.msra.mxu0 %v1031
    %1279 = vmatprep.subr.bf16.mxu0 %v1036
    %1280 = vmatpush1.bf16.msra.mxu0 %v1035
    %1281 = vmatprep.subr.bf16.mxu0 %v1040
    %1282 = vmatpush1.bf16.msra.mxu0 %v1039
    %1283 = vmatprep.subr.bf16.mxu0 %v1044
    %1284 = vmatpush1.bf16.msra.mxu0 %v1043
    %1285 = vmatprep.subr.bf16.mxu0 %v1048
    %1286 = vmatpush1.bf16.msra.mxu0 %v1047
    %1287 = vmatprep.subr.bf16.mxu0 %v1052
    %1288 = vmatpush1.bf16.msra.mxu0 %v1051
    %1289 = vmatprep.subr.bf16.mxu0 %v1056
    %1290 = vmatpush1.bf16.msra.mxu0 %v1055
    %1291 = vmatprep.subr.bf16.mxu0 %v1060
    %1292 = vmatpush1.bf16.msra.mxu0 %v1059
    %1293 = vmatprep.subr.bf16.mxu0 %v1064
    %1294 = vmatpush1.bf16.msra.mxu0 %v1063
    %1295 = vmatprep.subr.bf16.mxu0 %v1068
    %1296 = vmatpush1.bf16.msra.mxu0 %v1067
    %1297 = vmatprep.subr.bf16.mxu0 %v1072
    %1298 = vmatpush1.bf16.msra.mxu0 %v1071
    %1299 = vmatprep.mubr.bf16.mxu0 %v446
    %1300 = vmatmul.mubr.bf16.gmra.mrb[0].mxu0 %v445
    %v1301 = vpop.f32.mrb[0].mxu0
    %v1302 = vadd.f32 %v610, %v1301
    %v1303 = vpop.f32.mrb[0].mxu0
    %v1304 = vadd.f32 %v614, %v1303
    %v1305 = vpop.f32.mrb[0].mxu0
    %v1306 = vadd.f32 %v610, %v1305
    %v1307 = vpop.f32.mrb[0].mxu0
    %v1308 = vadd.f32 %v614, %v1307
    %1309 = vmatprep.mubr.bf16.mxu0 %v450
    %1310 = vmatmul.mubr.bf16.gmra.mrb[0].mxu0 %v449
    %v1311 = vpop.f32.mrb[0].mxu0
    %v1312 = vadd.f32 %v610, %v1311
    %v1313 = vpop.f32.mrb[0].mxu0
    %v1314 = vadd.f32 %v614, %v1313
    %v1315 = vpop.f32.mrb[0].mxu0
    %v1316 = vadd.f32 %v610, %v1315
    %v1317 = vpop.f32.mrb[0].mxu0
    %v1318 = vadd.f32 %v614, %v1317
    %1319 = vmatprep.mubr.bf16.mxu0 %v454
    %1320 = vmatmul.mubr.bf16.gmra.mrb[0].mxu0 %v453
    %v1321 = vpop.f32.mrb[0].mxu0
    %v1322 = vadd.f32 %v610, %v1321
    %v1323 = vpop.f32.mrb[0].mxu0
    %v1324 = vadd.f32 %v614, %v1323
    %v1325 = vpop.f32.mrb[0].mxu0
    %v1326 = vadd.f32 %v610, %v1325
    %v1327 = vpop.f32.mrb[0].mxu0
    %v1328 = vadd.f32 %v614, %v1327
    %1329 = vmatprep.mubr.bf16.mxu0 %v458
    %1330 = vmatmul.mubr.bf16.gmra.mrb[0].mxu0 %v457
    %v1331 = vpop.f32.mrb[0].mxu0
    %v1332 = vadd.f32 %v610, %v1331
    %v1333 = vpop.f32.mrb[0].mxu0
    %v1334 = vadd.f32 %v614, %v1333
    %v1335 = vpop.f32.mrb[0].mxu0
    %v1336 = vadd.f32 %v610, %v1335
    %v1337 = vpop.f32.mrb[0].mxu0
    %v1338 = vadd.f32 %v614, %v1337
    %1339 = vmatprep.mubr.bf16.mxu0 %v462
    %1340 = vmatmul.mubr.bf16.gmra.mrb[0].mxu0 %v461
    %v1341 = vpop.f32.mrb[0].mxu0
    %v1342 = vadd.f32 %v610, %v1341
    %v1343 = vpop.f32.mrb[0].mxu0
    %v1344 = vadd.f32 %v614, %v1343
    %v1345 = vpop.f32.mrb[0].mxu0
    %v1346 = vadd.f32 %v610, %v1345
    %v1347 = vpop.f32.mrb[0].mxu0
    %v1348 = vadd.f32 %v614, %v1347
    %1349 = vmatprep.mubr.bf16.mxu0 %v466
    %1350 = vmatmul.mubr.bf16.gmra.mrb[0].mxu0 %v465
    %v1351 = vpop.f32.mrb[0].mxu0
    %v1352 = vadd.f32 %v610, %v1351
    %v1353 = vpop.f32.mrb[0].mxu0
    %v1354 = vadd.f32 %v614, %v1353
    %v1355 = vpop.f32.mrb[0].mxu0
    %v1356 = vadd.f32 %v610, %v1355
    %v1357 = vpop.f32.mrb[0].mxu0
    %v1358 = vadd.f32 %v614, %v1357
    %1359 = vmatprep.mubr.bf16.mxu0 %v470
    %1360 = vmatmul.mubr.bf16.gmra.mrb[0].mxu0 %v469
    %v1361 = vpop.f32.mrb[0].mxu0
    %v1362 = vadd.f32 %v610, %v1361
    %v1363 = vpop.f32.mrb[0].mxu0
    %v1364 = vadd.f32 %v614, %v1363
    %v1365 = vpop.f32.mrb[0].mxu0
    %v1366 = vadd.f32 %v610, %v1365
    %v1367 = vpop.f32.mrb[0].mxu0
    %v1368 = vadd.f32 %v614, %v1367
    %1369 = vmatprep.mubr.bf16.mxu0 %v474
    %1370 = vmatmul.mubr.bf16.gmra.mrb[0].mxu0 %v473
    %v1371 = vpop.f32.mrb[0].mxu0
    %v1372 = vadd.f32 %v610, %v1371
    %v1373 = vpop.f32.mrb[0].mxu0
    %v1374 = vadd.f32 %v614, %v1373
    %v1375 = vpop.f32.mrb[0].mxu0
    %v1376 = vadd.f32 %v610, %v1375
    %v1377 = vpop.f32.mrb[0].mxu0
    %v1378 = vadd.f32 %v614, %v1377
    %1379 = vdwg.mxu0
    %1380 = vmatprep.subr.bf16.mxu0 %v1076
    %1381 = vmatpush1.bf16.msra.mxu0 %v1075
    %1382 = vmatprep.subr.bf16.mxu0 %v1080
    %1383 = vmatpush1.bf16.msra.mxu0 %v1079
    %1384 = vmatprep.subr.bf16.mxu0 %v1084
    %1385 = vmatpush1.bf16.msra.mxu0 %v1083
    %1386 = vmatprep.subr.bf16.mxu0 %v1088
    %1387 = vmatpush1.bf16.msra.mxu0 %v1087
    %1388 = vmatprep.subr.bf16.mxu0 %v1092
    %1389 = vmatpush1.bf16.msra.mxu0 %v1091
    %1390 = vmatprep.subr.bf16.mxu0 %v1096
    %1391 = vmatpush1.bf16.msra.mxu0 %v1095
    %1392 = vmatprep.subr.bf16.mxu0 %v1100
    %1393 = vmatpush1.bf16.msra.mxu0 %v1099
    %1394 = vmatprep.subr.bf16.mxu0 %v1104
    %1395 = vmatpush1.bf16.msra.mxu0 %v1103
    %1396 = vmatprep.subr.bf16.mxu0 %v1108
    %1397 = vmatpush1.bf16.msra.mxu0 %v1107
    %1398 = vmatprep.subr.bf16.mxu0 %v1112
    %1399 = vmatpush1.bf16.msra.mxu0 %v1111
    %1400 = vmatprep.subr.bf16.mxu0 %v1116
    %1401 = vmatpush1.bf16.msra.mxu0 %v1115
    %1402 = vmatprep.subr.bf16.mxu0 %v1120
    %1403 = vmatpush1.bf16.msra.mxu0 %v1119
    %1404 = vmatprep.subr.bf16.mxu0 %v1124
    %1405 = vmatpush1.bf16.msra.mxu0 %v1123
    %1406 = vmatprep.subr.bf16.mxu0 %v1128
    %1407 = vmatpush1.bf16.msra.mxu0 %v1127
    %1408 = vmatprep.subr.bf16.mxu0 %v1132
    %1409 = vmatpush1.bf16.msra.mxu0 %v1131
    %1410 = vmatprep.subr.bf16.mxu0 %v1136
    %1411 = vmatpush1.bf16.msra.mxu0 %v1135
    %1412 = vmatprep.mubr.bf16.mxu0 %v448
    %1413 = vmatmul.mubr.bf16.gmra.mrb[0].mxu0 %v447
    %v1414 = vpop.f32.mrb[0].mxu0
    %v1415 = vadd.f32 %v1302, %v1414
    %v1416 = vpop.f32.mrb[0].mxu0
    %v1417 = vadd.f32 %v1304, %v1416
    %v1418 = vpop.f32.mrb[0].mxu0
    %v1419 = vadd.f32 %v1306, %v1418
    %v1420 = vpop.f32.mrb[0].mxu0
    %v1421 = vadd.f32 %v1308, %v1420
    %1422 = vmatprep.mubr.bf16.mxu0 %v452
    %1423 = vmatmul.mubr.bf16.gmra.mrb[0].mxu0 %v451
    %v1424 = vpop.f32.mrb[0].mxu0
    %v1425 = vadd.f32 %v1312, %v1424
    %v1426 = vpop.f32.mrb[0].mxu0
    %v1427 = vadd.f32 %v1314, %v1426
    %v1428 = vpop.f32.mrb[0].mxu0
    %v1429 = vadd.f32 %v1316, %v1428
    %v1430 = vpop.f32.mrb[0].mxu0
    %v1431 = vadd.f32 %v1318, %v1430
    %1432 = vmatprep.mubr.bf16.mxu0 %v456
    %1433 = vmatmul.mubr.bf16.gmra.mrb[0].mxu0 %v455
    %v1434 = vpop.f32.mrb[0].mxu0
    %v1435 = vadd.f32 %v1322, %v1434
    %v1436 = vpop.f32.mrb[0].mxu0
    %v1437 = vadd.f32 %v1324, %v1436
    %v1438 = vpop.f32.mrb[0].mxu0
    %v1439 = vadd.f32 %v1326, %v1438
    %v1440 = vpop.f32.mrb[0].mxu0
    %v1441 = vadd.f32 %v1328, %v1440
    %1442 = vmatprep.mubr.bf16.mxu0 %v460
    %1443 = vmatmul.mubr.bf16.gmra.mrb[0].mxu0 %v459
    %v1444 = vpop.f32.mrb[0].mxu0
    %v1445 = vadd.f32 %v1332, %v1444
    %v1446 = vpop.f32.mrb[0].mxu0
    %v1447 = vadd.f32 %v1334, %v1446
    %v1448 = vpop.f32.mrb[0].mxu0
    %v1449 = vadd.f32 %v1336, %v1448
    %v1450 = vpop.f32.mrb[0].mxu0
    %v1451 = vadd.f32 %v1338, %v1450
    %1452 = vmatprep.mubr.bf16.mxu0 %v464
    %1453 = vmatmul.mubr.bf16.gmra.mrb[0].mxu0 %v463
    %v1454 = vpop.f32.mrb[0].mxu0
    %v1455 = vadd.f32 %v1342, %v1454
    %v1456 = vpop.f32.mrb[0].mxu0
    %v1457 = vadd.f32 %v1344, %v1456
    %v1458 = vpop.f32.mrb[0].mxu0
    %v1459 = vadd.f32 %v1346, %v1458
    %v1460 = vpop.f32.mrb[0].mxu0
    %v1461 = vadd.f32 %v1348, %v1460
    %1462 = vmatprep.mubr.bf16.mxu0 %v468
    %1463 = vmatmul.mubr.bf16.gmra.mrb[0].mxu0 %v467
    %v1464 = vpop.f32.mrb[0].mxu0
    %v1465 = vadd.f32 %v1352, %v1464
    %v1466 = vpop.f32.mrb[0].mxu0
    %v1467 = vadd.f32 %v1354, %v1466
    %v1468 = vpop.f32.mrb[0].mxu0
    %v1469 = vadd.f32 %v1356, %v1468
    %v1470 = vpop.f32.mrb[0].mxu0
    %v1471 = vadd.f32 %v1358, %v1470
    %1472 = vmatprep.mubr.bf16.mxu0 %v472
    %1473 = vmatmul.mubr.bf16.gmra.mrb[0].mxu0 %v471
    %v1474 = vpop.f32.mrb[0].mxu0
    %v1475 = vadd.f32 %v1362, %v1474
    %v1476 = vpop.f32.mrb[0].mxu0
    %v1477 = vadd.f32 %v1364, %v1476
    %v1478 = vpop.f32.mrb[0].mxu0
    %v1479 = vadd.f32 %v1366, %v1478
    %v1480 = vpop.f32.mrb[0].mxu0
    %v1481 = vadd.f32 %v1368, %v1480
    %1482 = vmatprep.mubr.bf16.mxu0 %v476
    %1483 = vmatmul.mubr.bf16.gmra.mrb[0].mxu0 %v475
    %v1484 = vpop.f32.mrb[0].mxu0
    %v1485 = vadd.f32 %v1372, %v1484
    %v1486 = vpop.f32.mrb[0].mxu0
    %v1487 = vadd.f32 %v1374, %v1486
    %v1488 = vpop.f32.mrb[0].mxu0
    %v1489 = vadd.f32 %v1376, %v1488
    %v1490 = vpop.f32.mrb[0].mxu0
    %v1491 = vadd.f32 %v1378, %v1490
    %1492 = vdwg.mxu0
    %1493 = vmatprep.subr.bf16.mxu0 %v1014
    %1494 = vmatpush1.bf16.msra.mxu0 %v1013
    %1495 = vmatprep.subr.bf16.mxu0 %v1018
    %1496 = vmatpush1.bf16.msra.mxu0 %v1017
    %1497 = vmatprep.subr.bf16.mxu0 %v1022
    %1498 = vmatpush1.bf16.msra.mxu0 %v1021
    %1499 = vmatprep.subr.bf16.mxu0 %v1026
    %1500 = vmatpush1.bf16.msra.mxu0 %v1025
    %1501 = vmatprep.subr.bf16.mxu0 %v1030
    %1502 = vmatpush1.bf16.msra.mxu0 %v1029
    %1503 = vmatprep.subr.bf16.mxu0 %v1034
    %1504 = vmatpush1.bf16.msra.mxu0 %v1033
    %1505 = vmatprep.subr.bf16.mxu0 %v1038
    %1506 = vmatpush1.bf16.msra.mxu0 %v1037
    %1507 = vmatprep.subr.bf16.mxu0 %v1042
    %1508 = vmatpush1.bf16.msra.mxu0 %v1041
    %1509 = vmatprep.subr.bf16.mxu0 %v1046
    %1510 = vmatpush1.bf16.msra.mxu0 %v1045
    %1511 = vmatprep.subr.bf16.mxu0 %v1050
    %1512 = vmatpush1.bf16.msra.mxu0 %v1049
    %1513 = vmatprep.subr.bf16.mxu0 %v1054
    %1514 = vmatpush1.bf16.msra.mxu0 %v1053
    %1515 = vmatprep.subr.bf16.mxu0 %v1058
    %1516 = vmatpush1.bf16.msra.mxu0 %v1057
    %1517 = vmatprep.subr.bf16.mxu0 %v1062
    %1518 = vmatpush1.bf16.msra.mxu0 %v1061
    %1519 = vmatprep.subr.bf16.mxu0 %v1066
    %1520 = vmatpush1.bf16.msra.mxu0 %v1065
    %1521 = vmatprep.subr.bf16.mxu0 %v1070
    %1522 = vmatpush1.bf16.msra.mxu0 %v1069
    %1523 = vmatprep.subr.bf16.mxu0 %v1074
    %1524 = vmatpush1.bf16.msra.mxu0 %v1073
    %1525 = vmatprep.mubr.bf16.mxu0 %v446
    %1526 = vmatmul.mubr.bf16.gmra.mrb[0].mxu0 %v445
    %v1527 = vpop.f32.mrb[0].mxu0
    %v1528 = vadd.f32 %v618, %v1527
    %v1529 = vpop.f32.mrb[0].mxu0
    %v1530 = vadd.f32 %v622, %v1529
    %v1531 = vpop.f32.mrb[0].mxu0
    %v1532 = vadd.f32 %v618, %v1531
    %v1533 = vpop.f32.mrb[0].mxu0
    %v1534 = vadd.f32 %v622, %v1533
    %1535 = vmatprep.mubr.bf16.mxu0 %v450
    %1536 = vmatmul.mubr.bf16.gmra.mrb[0].mxu0 %v449
    %v1537 = vpop.f32.mrb[0].mxu0
    %v1538 = vadd.f32 %v618, %v1537
    %v1539 = vpop.f32.mrb[0].mxu0
    %v1540 = vadd.f32 %v622, %v1539
    %v1541 = vpop.f32.mrb[0].mxu0
    %v1542 = vadd.f32 %v618, %v1541
    %v1543 = vpop.f32.mrb[0].mxu0
    %v1544 = vadd.f32 %v622, %v1543
    %1545 = vmatprep.mubr.bf16.mxu0 %v454
    %1546 = vmatmul.mubr.bf16.gmra.mrb[0].mxu0 %v453
    %v1547 = vpop.f32.mrb[0].mxu0
    %v1548 = vadd.f32 %v618, %v1547
    %v1549 = vpop.f32.mrb[0].mxu0
    %v1550 = vadd.f32 %v622, %v1549
    %v1551 = vpop.f32.mrb[0].mxu0
    %v1552 = vadd.f32 %v618, %v1551
    %v1553 = vpop.f32.mrb[0].mxu0
    %v1554 = vadd.f32 %v622, %v1553
    %1555 = vmatprep.mubr.bf16.mxu0 %v458
    %1556 = vmatmul.mubr.bf16.gmra.mrb[0].mxu0 %v457
    %v1557 = vpop.f32.mrb[0].mxu0
    %v1558 = vadd.f32 %v618, %v1557
    %v1559 = vpop.f32.mrb[0].mxu0
    %v1560 = vadd.f32 %v622, %v1559
    %v1561 = vpop.f32.mrb[0].mxu0
    %v1562 = vadd.f32 %v618, %v1561
    %v1563 = vpop.f32.mrb[0].mxu0
    %v1564 = vadd.f32 %v622, %v1563
    %1565 = vmatprep.mubr.bf16.mxu0 %v462
    %1566 = vmatmul.mubr.bf16.gmra.mrb[0].mxu0 %v461
    %v1567 = vpop.f32.mrb[0].mxu0
    %v1568 = vadd.f32 %v618, %v1567
    %v1569 = vpop.f32.mrb[0].mxu0
    %v1570 = vadd.f32 %v622, %v1569
    %v1571 = vpop.f32.mrb[0].mxu0
    %v1572 = vadd.f32 %v618, %v1571
    %v1573 = vpop.f32.mrb[0].mxu0
    %v1574 = vadd.f32 %v622, %v1573
    %1575 = vmatprep.mubr.bf16.mxu0 %v466
    %1576 = vmatmul.mubr.bf16.gmra.mrb[0].mxu0 %v465
    %v1577 = vpop.f32.mrb[0].mxu0
    %v1578 = vadd.f32 %v618, %v1577
    %v1579 = vpop.f32.mrb[0].mxu0
    %v1580 = vadd.f32 %v622, %v1579
    %v1581 = vpop.f32.mrb[0].mxu0
    %v1582 = vadd.f32 %v618, %v1581
    %v1583 = vpop.f32.mrb[0].mxu0
    %v1584 = vadd.f32 %v622, %v1583
    %1585 = vmatprep.mubr.bf16.mxu0 %v470
    %1586 = vmatmul.mubr.bf16.gmra.mrb[0].mxu0 %v469
    %v1587 = vpop.f32.mrb[0].mxu0
    %v1588 = vadd.f32 %v618, %v1587
    %v1589 = vpop.f32.mrb[0].mxu0
    %v1590 = vadd.f32 %v622, %v1589
    %v1591 = vpop.f32.mrb[0].mxu0
    %v1592 = vadd.f32 %v618, %v1591
    %v1593 = vpop.f32.mrb[0].mxu0
    %v1594 = vadd.f32 %v622, %v1593
    %1595 = vmatprep.mubr.bf16.mxu0 %v474
    %1596 = vmatmul.mubr.bf16.gmra.mrb[0].mxu0 %v473
    %v1597 = vpop.f32.mrb[0].mxu0
    %v1598 = vadd.f32 %v618, %v1597
    %v1599 = vpop.f32.mrb[0].mxu0
    %v1600 = vadd.f32 %v622, %v1599
    %v1601 = vpop.f32.mrb[0].mxu0
    %v1602 = vadd.f32 %v618, %v1601
    %v1603 = vpop.f32.mrb[0].mxu0
    %v1604 = vadd.f32 %v622, %v1603
    %1605 = vdwg.mxu0
    %1606 = vmatprep.subr.bf16.mxu0 %v1078
    %1607 = vmatpush1.bf16.msra.mxu0 %v1077
    %1608 = vmatprep.subr.bf16.mxu0 %v1082
    %1609 = vmatpush1.bf16.msra.mxu0 %v1081
    %1610 = vmatprep.subr.bf16.mxu0 %v1086
    %1611 = vmatpush1.bf16.msra.mxu0 %v1085
    %1612 = vmatprep.subr.bf16.mxu0 %v1090
    %1613 = vmatpush1.bf16.msra.mxu0 %v1089
    %1614 = vmatprep.subr.bf16.mxu0 %v1094
    %1615 = vmatpush1.bf16.msra.mxu0 %v1093
    %1616 = vmatprep.subr.bf16.mxu0 %v1098
    %1617 = vmatpush1.bf16.msra.mxu0 %v1097
    %1618 = vmatprep.subr.bf16.mxu0 %v1102
    %1619 = vmatpush1.bf16.msra.mxu0 %v1101
    %1620 = vmatprep.subr.bf16.mxu0 %v1106
    %1621 = vmatpush1.bf16.msra.mxu0 %v1105
    %1622 = vmatprep.subr.bf16.mxu0 %v1110
    %1623 = vmatpush1.bf16.msra.mxu0 %v1109
    %1624 = vmatprep.subr.bf16.mxu0 %v1114
    %1625 = vmatpush1.bf16.msra.mxu0 %v1113
    %1626 = vmatprep.subr.bf16.mxu0 %v1118
    %1627 = vmatpush1.bf16.msra.mxu0 %v1117
    %1628 = vmatprep.subr.bf16.mxu0 %v1122
    %1629 = vmatpush1.bf16.msra.mxu0 %v1121
    %1630 = vmatprep.subr.bf16.mxu0 %v1126
    %1631 = vmatpush1.bf16.msra.mxu0 %v1125
    %1632 = vmatprep.subr.bf16.mxu0 %v1130
    %1633 = vmatpush1.bf16.msra.mxu0 %v1129
    %1634 = vmatprep.subr.bf16.mxu0 %v1134
    %1635 = vmatpush1.bf16.msra.mxu0 %v1133
    %1636 = vmatprep.subr.bf16.mxu0 %v1138
    %1637 = vmatpush1.bf16.msra.mxu0 %v1137
    %1638 = vmatprep.mubr.bf16.mxu0 %v448
    %1639 = vmatmul.mubr.bf16.gmra.mrb[0].mxu0 %v447
    %v1640 = vpop.f32.mrb[0].mxu0
    %v1641 = vadd.f32 %v1528, %v1640
    %v1642 = vpop.f32.mrb[0].mxu0
    %v1643 = vadd.f32 %v1530, %v1642
    %v1644 = vpop.f32.mrb[0].mxu0
    %v1645 = vadd.f32 %v1532, %v1644
    %v1646 = vpop.f32.mrb[0].mxu0
    %v1647 = vadd.f32 %v1534, %v1646
    %1648 = vmatprep.mubr.bf16.mxu0 %v452
    %1649 = vmatmul.mubr.bf16.gmra.mrb[0].mxu0 %v451
    %v1650 = vpop.f32.mrb[0].mxu0
    %v1651 = vadd.f32 %v1538, %v1650
    %v1652 = vpop.f32.mrb[0].mxu0
    %v1653 = vadd.f32 %v1540, %v1652
    %v1654 = vpop.f32.mrb[0].mxu0
    %v1655 = vadd.f32 %v1542, %v1654
    %v1656 = vpop.f32.mrb[0].mxu0
    %v1657 = vadd.f32 %v1544, %v1656
    %1658 = vmatprep.mubr.bf16.mxu0 %v456
    %1659 = vmatmul.mubr.bf16.gmra.mrb[0].mxu0 %v455
    %v1660 = vpop.f32.mrb[0].mxu0
    %v1661 = vadd.f32 %v1548, %v1660
    %v1662 = vpop.f32.mrb[0].mxu0
    %v1663 = vadd.f32 %v1550, %v1662
    %v1664 = vpop.f32.mrb[0].mxu0
    %v1665 = vadd.f32 %v1552, %v1664
    %v1666 = vpop.f32.mrb[0].mxu0
    %v1667 = vadd.f32 %v1554, %v1666
    %1668 = vmatprep.mubr.bf16.mxu0 %v460
    %1669 = vmatmul.mubr.bf16.gmra.mrb[0].mxu0 %v459
    %v1670 = vpop.f32.mrb[0].mxu0
    %v1671 = vadd.f32 %v1558, %v1670
    %v1672 = vpop.f32.mrb[0].mxu0
    %v1673 = vadd.f32 %v1560, %v1672
    %v1674 = vpop.f32.mrb[0].mxu0
    %v1675 = vadd.f32 %v1562, %v1674
    %v1676 = vpop.f32.mrb[0].mxu0
    %v1677 = vadd.f32 %v1564, %v1676
    %1678 = vmatprep.mubr.bf16.mxu0 %v464
    %1679 = vmatmul.mubr.bf16.gmra.mrb[0].mxu0 %v463
    %v1680 = vpop.f32.mrb[0].mxu0
    %v1681 = vadd.f32 %v1568, %v1680
    %v1682 = vpop.f32.mrb[0].mxu0
    %v1683 = vadd.f32 %v1570, %v1682
    %v1684 = vpop.f32.mrb[0].mxu0
    %v1685 = vadd.f32 %v1572, %v1684
    %v1686 = vpop.f32.mrb[0].mxu0
    %v1687 = vadd.f32 %v1574, %v1686
    %1688 = vmatprep.mubr.bf16.mxu0 %v468
    %1689 = vmatmul.mubr.bf16.gmra.mrb[0].mxu0 %v467
    %v1690 = vpop.f32.mrb[0].mxu0
    %v1691 = vadd.f32 %v1578, %v1690
    %v1692 = vpop.f32.mrb[0].mxu0
    %v1693 = vadd.f32 %v1580, %v1692
    %v1694 = vpop.f32.mrb[0].mxu0
    %v1695 = vadd.f32 %v1582, %v1694
    %v1696 = vpop.f32.mrb[0].mxu0
    %v1697 = vadd.f32 %v1584, %v1696
    %1698 = vmatprep.mubr.bf16.mxu0 %v472
    %1699 = vmatmul.mubr.bf16.gmra.mrb[0].mxu0 %v471
    %v1700 = vpop.f32.mrb[0].mxu0
    %v1701 = vadd.f32 %v1588, %v1700
    %v1702 = vpop.f32.mrb[0].mxu0
    %v1703 = vadd.f32 %v1590, %v1702
    %v1704 = vpop.f32.mrb[0].mxu0
    %v1705 = vadd.f32 %v1592, %v1704
    %v1706 = vpop.f32.mrb[0].mxu0
    %v1707 = vadd.f32 %v1594, %v1706
    %1708 = vmatprep.mubr.bf16.mxu0 %v476
    %1709 = vmatmul.mubr.bf16.gmra.mrb[0].mxu0 %v475
    %v1710 = vpop.f32.mrb[0].mxu0
    %v1711 = vadd.f32 %v1598, %v1710
    %v1712 = vpop.f32.mrb[0].mxu0
    %v1713 = vadd.f32 %v1600, %v1712
    %v1714 = vpop.f32.mrb[0].mxu0
    %v1715 = vadd.f32 %v1602, %v1714
    %v1716 = vpop.f32.mrb[0].mxu0
    %v1717 = vadd.f32 %v1604, %v1716
    %1718 = vdwg.mxu0
    %v1719 = vmax.f32 %v1415, 0.0
    %v1720 = vmax.f32 %v1417, 0.0
    %v1721 = vmax.f32 %v1641, 0.0
    %v1722 = vmax.f32 %v1643, 0.0
    %v1723 = vmax.f32 %v1419, 0.0
    %v1724 = vmax.f32 %v1421, 0.0
    %v1725 = vmax.f32 %v1645, 0.0
    %v1726 = vmax.f32 %v1647, 0.0
    %v1727 = vmax.f32 %v1425, 0.0
    %v1728 = vmax.f32 %v1427, 0.0
    %v1729 = vmax.f32 %v1651, 0.0
    %v1730 = vmax.f32 %v1653, 0.0
    %v1731 = vmax.f32 %v1429, 0.0
    %v1732 = vmax.f32 %v1431, 0.0
    %v1733 = vmax.f32 %v1655, 0.0
    %v1734 = vmax.f32 %v1657, 0.0
    %v1735 = vmax.f32 %v1435, 0.0
    %v1736 = vmax.f32 %v1437, 0.0
    %v1737 = vmax.f32 %v1661, 0.0
    %v1738 = vmax.f32 %v1663, 0.0
    %v1739 = vmax.f32 %v1439, 0.0
    %v1740 = vmax.f32 %v1441, 0.0
    %v1741 = vmax.f32 %v1665, 0.0
    %v1742 = vmax.f32 %v1667, 0.0
    %v1743 = vmax.f32 %v1445, 0.0
    %v1744 = vmax.f32 %v1447, 0.0
    %v1745 = vmax.f32 %v1671, 0.0
    %v1746 = vmax.f32 %v1673, 0.0
    %v1747 = vmax.f32 %v1449, 0.0
    %v1748 = vmax.f32 %v1451, 0.0
    %v1749 = vmax.f32 %v1675, 0.0
    %v1750 = vmax.f32 %v1677, 0.0
    %v1751 = vmax.f32 %v1455, 0.0
    %v1752 = vmax.f32 %v1457, 0.0
    %v1753 = vmax.f32 %v1681, 0.0
    %v1754 = vmax.f32 %v1683, 0.0
    %v1755 = vmax.f32 %v1459, 0.0
    %v1756 = vmax.f32 %v1461, 0.0
    %v1757 = vmax.f32 %v1685, 0.0
    %v1758 = vmax.f32 %v1687, 0.0
    %v1759 = vmax.f32 %v1465, 0.0
    %v1760 = vmax.f32 %v1467, 0.0
    %v1761 = vmax.f32 %v1691, 0.0
    %v1762 = vmax.f32 %v1693, 0.0
    %v1763 = vmax.f32 %v1469, 0.0
    %v1764 = vmax.f32 %v1471, 0.0
    %v1765 = vmax.f32 %v1695, 0.0
    %v1766 = vmax.f32 %v1697, 0.0
    %v1767 = vmax.f32 %v1475, 0.0
    %v1768 = vmax.f32 %v1477, 0.0
    %v1769 = vmax.f32 %v1701, 0.0
    %v1770 = vmax.f32 %v1703, 0.0
    %v1771 = vmax.f32 %v1479, 0.0
    %v1772 = vmax.f32 %v1481, 0.0
    %v1773 = vmax.f32 %v1705, 0.0
    %v1774 = vmax.f32 %v1707, 0.0
    %v1775 = vmax.f32 %v1485, 0.0
    %v1776 = vmax.f32 %v1487, 0.0
    %v1777 = vmax.f32 %v1711, 0.0
    %v1778 = vmax.f32 %v1713, 0.0
    %v1779 = vmax.f32 %v1489, 0.0
    %v1780 = vmax.f32 %v1491, 0.0
    %v1781 = vmax.f32 %v1715, 0.0
    %v1782 = vmax.f32 %v1717, 0.0
    %v1783 = vpack.c.bf16 %v1723, %v1719
    %v1784 = vpack.c.bf16 %v1724, %v1720
    %v1785 = vpack.c.bf16 %v1725, %v1721
    %v1786 = vpack.c.bf16 %v1726, %v1722
    %v1787 = vpack.c.bf16 %v1731, %v1727
    %v1788 = vpack.c.bf16 %v1732, %v1728
    %v1789 = vpack.c.bf16 %v1733, %v1729
    %v1790 = vpack.c.bf16 %v1734, %v1730
    %v1791 = vpack.c.bf16 %v1739, %v1735
    %v1792 = vpack.c.bf16 %v1740, %v1736
    %v1793 = vpack.c.bf16 %v1741, %v1737
    %v1794 = vpack.c.bf16 %v1742, %v1738
    %v1795 = vpack.c.bf16 %v1747, %v1743
    %v1796 = vpack.c.bf16 %v1748, %v1744
    %v1797 = vpack.c.bf16 %v1749, %v1745
    %v1798 = vpack.c.bf16 %v1750, %v1746
    %v1799 = vpack.c.bf16 %v1755, %v1751
    %v1800 = vpack.c.bf16 %v1756, %v1752
    %v1801 = vpack.c.bf16 %v1757, %v1753
    %v1802 = vpack.c.bf16 %v1758, %v1754
    %v1803 = vpack.c.bf16 %v1763, %v1759
    %v1804 = vpack.c.bf16 %v1764, %v1760
    %v1805 = vpack.c.bf16 %v1765, %v1761
    %v1806 = vpack.c.bf16 %v1766, %v1762
    %v1807 = vpack.c.bf16 %v1771, %v1767
    %v1808 = vpack.c.bf16 %v1772, %v1768
    %v1809 = vpack.c.bf16 %v1773, %v1769
    %v1810 = vpack.c.bf16 %v1774, %v1770
    %v1811 = vpack.c.bf16 %v1779, %v1775
    %v1812 = vpack.c.bf16 %v1780, %v1776
    %v1813 = vpack.c.bf16 %v1781, %v1777
    %v1814 = vpack.c.bf16 %v1782, %v1778
    %v1815 = vld [vmem:[%s5] sm:$0xf]
    %v1816 = vld [vmem:[%s5 + $0x4] sm:$0xf]
    %v1817 = vld [vmem:[%s5 + $0x8] sm:$0xf]
    %v1818 = vld [vmem:[%s5 + $0xc] sm:$0xf]
    %v1819 = vld [vmem:[%s5 + $0x10] sm:$0xf]
    %v1820 = vld [vmem:[%s5 + $0x14] sm:$0xf]
    %v1821 = vld [vmem:[%s5 + $0x18] sm:$0xf]
    %v1822 = vld [vmem:[%s5 + $0x1c] sm:$0xf]
    %v1823 = vld [vmem:[%s5 + $0x20] sm:$0xf]
    %v1824 = vld [vmem:[%s5 + $0x24] sm:$0xf]
    %v1825 = vld [vmem:[%s5 + $0x28] sm:$0xf]
    %v1826 = vld [vmem:[%s5 + $0x2c] sm:$0xf]
    %v1827 = vld [vmem:[%s5 + $0x30] sm:$0xf]
    %v1828 = vld [vmem:[%s5 + $0x34] sm:$0xf]
    %v1829 = vld [vmem:[%s5 + $0x38] sm:$0xf]
    %v1830 = vld [vmem:[%s5 + $0x3c] sm:$0xf]
    %v1831 = vld [vmem:[%s5 + $0x40] sm:$0xf]
    %v1832 = vld [vmem:[%s5 + $0x44] sm:$0xf]
    %v1833 = vld [vmem:[%s5 + $0x48] sm:$0xf]
    %v1834 = vld [vmem:[%s5 + $0x4c] sm:$0xf]
    %v1835 = vld [vmem:[%s5 + $0x50] sm:$0xf]
    %v1836 = vld [vmem:[%s5 + $0x54] sm:$0xf]
    %v1837 = vld [vmem:[%s5 + $0x58] sm:$0xf]
    %v1838 = vld [vmem:[%s5 + $0x5c] sm:$0xf]
    %v1839 = vld [vmem:[%s5 + $0x60] sm:$0xf]
    %v1840 = vld [vmem:[%s5 + $0x64] sm:$0xf]
    %v1841 = vld [vmem:[%s5 + $0x68] sm:$0xf]
    %v1842 = vld [vmem:[%s5 + $0x6c] sm:$0xf]
    %v1843 = vld [vmem:[%s5 + $0x70] sm:$0xf]
    %v1844 = vld [vmem:[%s5 + $0x74] sm:$0xf]
    %v1845 = vld [vmem:[%s5 + $0x78] sm:$0xf]
    %v1846 = vld [vmem:[%s5 + $0x7c] sm:$0xf]
    %v1847 = vld [vmem:[%s5 + $0x80] sm:$0xf]
    %v1848 = vld [vmem:[%s5 + $0x84] sm:$0xf]
    %v1849 = vld [vmem:[%s5 + $0x88] sm:$0xf]
    %v1850 = vld [vmem:[%s5 + $0x8c] sm:$0xf]
    %v1851 = vld [vmem:[%s5 + $0x90] sm:$0xf]
    %v1852 = vld [vmem:[%s5 + $0x94] sm:$0xf]
    %v1853 = vld [vmem:[%s5 + $0x98] sm:$0xf]
    %v1854 = vld [vmem:[%s5 + $0x9c] sm:$0xf]
    %v1855 = vld [vmem:[%s5 + $0xa0] sm:$0xf]
    %v1856 = vld [vmem:[%s5 + $0xa4] sm:$0xf]
    %v1857 = vld [vmem:[%s5 + $0xa8] sm:$0xf]
    %v1858 = vld [vmem:[%s5 + $0xac] sm:$0xf]
    %v1859 = vld [vmem:[%s5 + $0xb0] sm:$0xf]
    %v1860 = vld [vmem:[%s5 + $0xb4] sm:$0xf]
    %v1861 = vld [vmem:[%s5 + $0xb8] sm:$0xf]
    %v1862 = vld [vmem:[%s5 + $0xbc] sm:$0xf]
    %v1863 = vld [vmem:[%s5 + $0xc0] sm:$0xf]
    %v1864 = vld [vmem:[%s5 + $0xc4] sm:$0xf]
    %v1865 = vld [vmem:[%s5 + $0xc8] sm:$0xf]
    %v1866 = vld [vmem:[%s5 + $0xcc] sm:$0xf]
    %v1867 = vld [vmem:[%s5 + $0xd0] sm:$0xf]
    %v1868 = vld [vmem:[%s5 + $0xd4] sm:$0xf]
    %v1869 = vld [vmem:[%s5 + $0xd8] sm:$0xf]
    %v1870 = vld [vmem:[%s5 + $0xdc] sm:$0xf]
    %v1871 = vld [vmem:[%s5 + $0xe0] sm:$0xf]
    %v1872 = vld [vmem:[%s5 + $0xe4] sm:$0xf]
    %v1873 = vld [vmem:[%s5 + $0xe8] sm:$0xf]
    %v1874 = vld [vmem:[%s5 + $0xec] sm:$0xf]
    %v1875 = vld [vmem:[%s5 + $0xf0] sm:$0xf]
    %v1876 = vld [vmem:[%s5 + $0xf4] sm:$0xf]
    %v1877 = vld [vmem:[%s5 + $0xf8] sm:$0xf]
    %v1878 = vld [vmem:[%s5 + $0xfc] sm:$0xf]
    %v1879 = vld [vmem:[%s6] sm:$0x1]
    %v1881 = vlaneseq
    %v1882 = vshrl.u32 %v1881, 7
    %v1883 = vsub.s32 0, %v1882
    %v1884 = vrot.slane %v1879, %v1883
    %v1950 = vunpack.c.l.b16 %v1815
    %v1951 = vunpack.c.l.b16 %v1816
    %v1952 = vunpack.c.l.b16 %v1817
    %v1953 = vunpack.c.l.b16 %v1818
    %v1954 = vunpack.c.l.b16 %v1819
    %v1955 = vunpack.c.l.b16 %v1820
    %v1956 = vunpack.c.l.b16 %v1821
    %v1957 = vunpack.c.l.b16 %v1822
    %v1958 = vunpack.c.l.b16 %v1823
    %v1959 = vunpack.c.l.b16 %v1824
    %v1960 = vunpack.c.l.b16 %v1825
    %v1961 = vunpack.c.l.b16 %v1826
    %v1962 = vunpack.c.l.b16 %v1827
    %v1963 = vunpack.c.l.b16 %v1828
    %v1964 = vunpack.c.l.b16 %v1829
    %v1965 = vunpack.c.l.b16 %v1830
    %v1966 = vunpack.c.l.b16 %v1831
    %v1967 = vunpack.c.l.b16 %v1832
    %v1968 = vunpack.c.l.b16 %v1833
    %v1969 = vunpack.c.l.b16 %v1834
    %v1970 = vunpack.c.l.b16 %v1835
    %v1971 = vunpack.c.l.b16 %v1836
    %v1972 = vunpack.c.l.b16 %v1837
    %v1973 = vunpack.c.l.b16 %v1838
    %v1974 = vunpack.c.l.b16 %v1839
    %v1975 = vunpack.c.l.b16 %v1840
    %v1976 = vunpack.c.l.b16 %v1841
    %v1977 = vunpack.c.l.b16 %v1842
    %v1978 = vunpack.c.l.b16 %v1843
    %v1979 = vunpack.c.l.b16 %v1844
    %v1980 = vunpack.c.l.b16 %v1845
    %v1981 = vunpack.c.l.b16 %v1846
    %v1982 = vunpack.c.l.b16 %v1847
    %v1983 = vunpack.c.l.b16 %v1848
    %v1984 = vunpack.c.l.b16 %v1849
    %v1985 = vunpack.c.l.b16 %v1850
    %v1986 = vunpack.c.l.b16 %v1851
    %v1987 = vunpack.c.l.b16 %v1852
    %v1988 = vunpack.c.l.b16 %v1853
    %v1989 = vunpack.c.l.b16 %v1854
    %v1990 = vunpack.c.l.b16 %v1855
    %v1991 = vunpack.c.l.b16 %v1856
    %v1992 = vunpack.c.l.b16 %v1857
    %v1993 = vunpack.c.l.b16 %v1858
    %v1994 = vunpack.c.l.b16 %v1859
    %v1995 = vunpack.c.l.b16 %v1860
    %v1996 = vunpack.c.l.b16 %v1861
    %v1997 = vunpack.c.l.b16 %v1862
    %v1998 = vunpack.c.l.b16 %v1863
    %v1999 = vunpack.c.l.b16 %v1864
    %v2000 = vunpack.c.l.b16 %v1865
    %v2001 = vunpack.c.l.b16 %v1866
    %v2002 = vunpack.c.l.b16 %v1867
    %v2003 = vunpack.c.l.b16 %v1868
    %v2004 = vunpack.c.l.b16 %v1869
    %v2005 = vunpack.c.l.b16 %v1870
    %v2006 = vunpack.c.l.b16 %v1871
    %v2007 = vunpack.c.l.b16 %v1872
    %v2008 = vunpack.c.l.b16 %v1873
    %v2009 = vunpack.c.l.b16 %v1874
    %v2010 = vunpack.c.l.b16 %v1875
    %v2011 = vunpack.c.l.b16 %v1876
    %v2012 = vunpack.c.l.b16 %v1877
    %v2013 = vunpack.c.l.b16 %v1878
    %v2014 = vpack.c.b16 %v1951, %v1950
    %v2015 = vpack.c.b16 %v1953, %v1952
    %v2016 = vpack.c.b16 %v1955, %v1954
    %v2017 = vpack.c.b16 %v1957, %v1956
    %v2018 = vpack.c.b16 %v1959, %v1958
    %v2019 = vpack.c.b16 %v1961, %v1960
    %v2020 = vpack.c.b16 %v1963, %v1962
    %v2021 = vpack.c.b16 %v1965, %v1964
    %v2022 = vpack.c.b16 %v1967, %v1966
    %v2023 = vpack.c.b16 %v1969, %v1968
    %v2024 = vpack.c.b16 %v1971, %v1970
    %v2025 = vpack.c.b16 %v1973, %v1972
    %v2026 = vpack.c.b16 %v1975, %v1974
    %v2027 = vpack.c.b16 %v1977, %v1976
    %v2028 = vpack.c.b16 %v1979, %v1978
    %v2029 = vpack.c.b16 %v1981, %v1980
    %v2030 = vpack.c.b16 %v1983, %v1982
    %v2031 = vpack.c.b16 %v1985, %v1984
    %v2032 = vpack.c.b16 %v1987, %v1986
    %v2033 = vpack.c.b16 %v1989, %v1988
    %v2034 = vpack.c.b16 %v1991, %v1990
    %v2035 = vpack.c.b16 %v1993, %v1992
    %v2036 = vpack.c.b16 %v1995, %v1994
    %v2037 = vpack.c.b16 %v1997, %v1996
    %v2038 = vpack.c.b16 %v1999, %v1998
    %v2039 = vpack.c.b16 %v2001, %v2000
    %v2040 = vpack.c.b16 %v2003, %v2002
    %v2041 = vpack.c.b16 %v2005, %v2004
    %v2042 = vpack.c.b16 %v2007, %v2006
    %v2043 = vpack.c.b16 %v2009, %v2008
    %v2044 = vpack.c.b16 %v2011, %v2010
    %v2045 = vpack.c.b16 %v2013, %v2012
    %2078 = vmatprep.subr.bf16.mxu0 0
    %2079 = vmatpush1.bf16.msra.mxu0 %v2014
    %2080 = vmatprep.subr.bf16.mxu0 0
    %2081 = vmatpush1.bf16.msra.mxu0 %v2015
    %2082 = vmatprep.subr.bf16.mxu0 0
    %2083 = vmatpush1.bf16.msra.mxu0 %v2016
    %2084 = vmatprep.subr.bf16.mxu0 0
    %2085 = vmatpush1.bf16.msra.mxu0 %v2017
    %2086 = vmatprep.subr.bf16.mxu0 0
    %2087 = vmatpush1.bf16.msra.mxu0 %v2018
    %2088 = vmatprep.subr.bf16.mxu0 0
    %2089 = vmatpush1.bf16.msra.mxu0 %v2019
    %2090 = vmatprep.subr.bf16.mxu0 0
    %2091 = vmatpush1.bf16.msra.mxu0 %v2020
    %2092 = vmatprep.subr.bf16.mxu0 0
    %2093 = vmatpush1.bf16.msra.mxu0 %v2021
    %2094 = vmatprep.subr.bf16.mxu0 0
    %2095 = vmatpush1.bf16.msra.mxu0 %v2022
    %2096 = vmatprep.subr.bf16.mxu0 0
    %2097 = vmatpush1.bf16.msra.mxu0 %v2023
    %2098 = vmatprep.subr.bf16.mxu0 0
    %2099 = vmatpush1.bf16.msra.mxu0 %v2024
    %2100 = vmatprep.subr.bf16.mxu0 0
    %2101 = vmatpush1.bf16.msra.mxu0 %v2025
    %2102 = vmatprep.subr.bf16.mxu0 0
    %2103 = vmatpush1.bf16.msra.mxu0 %v2026
    %2104 = vmatprep.subr.bf16.mxu0 0
    %2105 = vmatpush1.bf16.msra.mxu0 %v2027
    %2106 = vmatprep.subr.bf16.mxu0 0
    %2107 = vmatpush1.bf16.msra.mxu0 %v2028
    %2108 = vmatprep.subr.bf16.mxu0 0
    %2109 = vmatpush1.bf16.msra.mxu0 %v2029
    %2110 = vmatprep.mubr.bf16.mxu0 %v1784
    %2111 = vmatmul.mubr.bf16.gmra.mrb[0].mxu0 %v1783
    %v2112 = vpop.f32.mrb[0].mxu0
    %v2113 = vadd.f32 %v1884, %v2112
    %v2114 = vpop.f32.mrb[0].mxu0
    %v2115 = vpop.f32.mrb[0].mxu0
    %v2116 = vadd.f32 %v1884, %v2115
    %v2117 = vpop.f32.mrb[0].mxu0
    %2118 = vmatprep.mubr.bf16.mxu0 %v1788
    %2119 = vmatmul.mubr.bf16.gmra.mrb[0].mxu0 %v1787
    %v2120 = vpop.f32.mrb[0].mxu0
    %v2121 = vadd.f32 %v1884, %v2120
    %v2122 = vpop.f32.mrb[0].mxu0
    %v2123 = vpop.f32.mrb[0].mxu0
    %v2124 = vadd.f32 %v1884, %v2123
    %v2125 = vpop.f32.mrb[0].mxu0
    %2126 = vmatprep.mubr.bf16.mxu0 %v1792
    %2127 = vmatmul.mubr.bf16.gmra.mrb[0].mxu0 %v1791
    %v2128 = vpop.f32.mrb[0].mxu0
    %v2129 = vadd.f32 %v1884, %v2128
    %v2130 = vpop.f32.mrb[0].mxu0
    %v2131 = vpop.f32.mrb[0].mxu0
    %v2132 = vadd.f32 %v1884, %v2131
    %v2133 = vpop.f32.mrb[0].mxu0
    %2134 = vmatprep.mubr.bf16.mxu0 %v1796
    %2135 = vmatmul.mubr.bf16.gmra.mrb[0].mxu0 %v1795
    %v2136 = vpop.f32.mrb[0].mxu0
    %v2137 = vadd.f32 %v1884, %v2136
    %v2138 = vpop.f32.mrb[0].mxu0
    %v2139 = vpop.f32.mrb[0].mxu0
    %v2140 = vadd.f32 %v1884, %v2139
    %v2141 = vpop.f32.mrb[0].mxu0
    %2142 = vmatprep.mubr.bf16.mxu0 %v1800
    %2143 = vmatmul.mubr.bf16.gmra.mrb[0].mxu0 %v1799
    %v2144 = vpop.f32.mrb[0].mxu0
    %v2145 = vadd.f32 %v1884, %v2144
    %v2146 = vpop.f32.mrb[0].mxu0
    %v2147 = vpop.f32.mrb[0].mxu0
    %v2148 = vadd.f32 %v1884, %v2147
    %v2149 = vpop.f32.mrb[0].mxu0
    %2150 = vmatprep.mubr.bf16.mxu0 %v1804
    %2151 = vmatmul.mubr.bf16.gmra.mrb[0].mxu0 %v1803
    %v2152 = vpop.f32.mrb[0].mxu0
    %v2153 = vadd.f32 %v1884, %v2152
    %v2154 = vpop.f32.mrb[0].mxu0
    %v2155 = vpop.f32.mrb[0].mxu0
    %v2156 = vadd.f32 %v1884, %v2155
    %v2157 = vpop.f32.mrb[0].mxu0
    %2158 = vmatprep.mubr.bf16.mxu0 %v1808
    %2159 = vmatmul.mubr.bf16.gmra.mrb[0].mxu0 %v1807
    %v2160 = vpop.f32.mrb[0].mxu0
    %v2161 = vadd.f32 %v1884, %v2160
    %v2162 = vpop.f32.mrb[0].mxu0
    %v2163 = vpop.f32.mrb[0].mxu0
    %v2164 = vadd.f32 %v1884, %v2163
    %v2165 = vpop.f32.mrb[0].mxu0
    %2166 = vmatprep.mubr.bf16.mxu0 %v1812
    %2167 = vmatmul.mubr.bf16.gmra.mrb[0].mxu0 %v1811
    %v2168 = vpop.f32.mrb[0].mxu0
    %v2169 = vadd.f32 %v1884, %v2168
    %v2170 = vpop.f32.mrb[0].mxu0
    %v2171 = vpop.f32.mrb[0].mxu0
    %v2172 = vadd.f32 %v1884, %v2171
    %v2173 = vpop.f32.mrb[0].mxu0
    %2174 = vdwg.mxu0
    %2175 = vmatprep.subr.bf16.mxu0 0
    %2176 = vmatpush1.bf16.msra.mxu0 %v2030
    %2177 = vmatprep.subr.bf16.mxu0 0
    %2178 = vmatpush1.bf16.msra.mxu0 %v2031
    %2179 = vmatprep.subr.bf16.mxu0 0
    %2180 = vmatpush1.bf16.msra.mxu0 %v2032
    %2181 = vmatprep.subr.bf16.mxu0 0
    %2182 = vmatpush1.bf16.msra.mxu0 %v2033
    %2183 = vmatprep.subr.bf16.mxu0 0
    %2184 = vmatpush1.bf16.msra.mxu0 %v2034
    %2185 = vmatprep.subr.bf16.mxu0 0
    %2186 = vmatpush1.bf16.msra.mxu0 %v2035
    %2187 = vmatprep.subr.bf16.mxu0 0
    %2188 = vmatpush1.bf16.msra.mxu0 %v2036
    %2189 = vmatprep.subr.bf16.mxu0 0
    %2190 = vmatpush1.bf16.msra.mxu0 %v2037
    %2191 = vmatprep.subr.bf16.mxu0 0
    %2192 = vmatpush1.bf16.msra.mxu0 %v2038
    %2193 = vmatprep.subr.bf16.mxu0 0
    %2194 = vmatpush1.bf16.msra.mxu0 %v2039
    %2195 = vmatprep.subr.bf16.mxu0 0
    %2196 = vmatpush1.bf16.msra.mxu0 %v2040
    %2197 = vmatprep.subr.bf16.mxu0 0
    %2198 = vmatpush1.bf16.msra.mxu0 %v2041
    %2199 = vmatprep.subr.bf16.mxu0 0
    %2200 = vmatpush1.bf16.msra.mxu0 %v2042
    %2201 = vmatprep.subr.bf16.mxu0 0
    %2202 = vmatpush1.bf16.msra.mxu0 %v2043
    %2203 = vmatprep.subr.bf16.mxu0 0
    %2204 = vmatpush1.bf16.msra.mxu0 %v2044
    %2205 = vmatprep.subr.bf16.mxu0 0
    %2206 = vmatpush1.bf16.msra.mxu0 %v2045
    %2207 = vmatprep.mubr.bf16.mxu0 %v1786
    %2208 = vmatmul.mubr.bf16.gmra.mrb[0].mxu0 %v1785
    %v2209 = vpop.f32.mrb[0].mxu0
    %v2210 = vadd.f32 %v2113, %v2209
    %v2211 = vpop.f32.mrb[0].mxu0
    %v2212 = vpop.f32.mrb[0].mxu0
    %v2213 = vadd.f32 %v2116, %v2212
    %v2214 = vpop.f32.mrb[0].mxu0
    %2215 = vmatprep.mubr.bf16.mxu0 %v1790
    %2216 = vmatmul.mubr.bf16.gmra.mrb[0].mxu0 %v1789
    %v2217 = vpop.f32.mrb[0].mxu0
    %v2218 = vadd.f32 %v2121, %v2217
    %v2219 = vpop.f32.mrb[0].mxu0
    %v2220 = vpop.f32.mrb[0].mxu0
    %v2221 = vadd.f32 %v2124, %v2220
    %v2222 = vpop.f32.mrb[0].mxu0
    %2223 = vmatprep.mubr.bf16.mxu0 %v1794
    %2224 = vmatmul.mubr.bf16.gmra.mrb[0].mxu0 %v1793
    %v2225 = vpop.f32.mrb[0].mxu0
    %v2226 = vadd.f32 %v2129, %v2225
    %v2227 = vpop.f32.mrb[0].mxu0
    %v2228 = vpop.f32.mrb[0].mxu0
    %v2229 = vadd.f32 %v2132, %v2228
    %v2230 = vpop.f32.mrb[0].mxu0
    %2231 = vmatprep.mubr.bf16.mxu0 %v1798
    %2232 = vmatmul.mubr.bf16.gmra.mrb[0].mxu0 %v1797
    %v2233 = vpop.f32.mrb[0].mxu0
    %v2234 = vadd.f32 %v2137, %v2233
    %v2235 = vpop.f32.mrb[0].mxu0
    %v2236 = vpop.f32.mrb[0].mxu0
    %v2237 = vadd.f32 %v2140, %v2236
    %v2238 = vpop.f32.mrb[0].mxu0
    %2239 = vmatprep.mubr.bf16.mxu0 %v1802
    %2240 = vmatmul.mubr.bf16.gmra.mrb[0].mxu0 %v1801
    %v2241 = vpop.f32.mrb[0].mxu0
    %v2242 = vadd.f32 %v2145, %v2241
    %v2243 = vpop.f32.mrb[0].mxu0
    %v2244 = vpop.f32.mrb[0].mxu0
    %v2245 = vadd.f32 %v2148, %v2244
    %v2246 = vpop.f32.mrb[0].mxu0
    %2247 = vmatprep.mubr.bf16.mxu0 %v1806
    %2248 = vmatmul.mubr.bf16.gmra.mrb[0].mxu0 %v1805
    %v2249 = vpop.f32.mrb[0].mxu0
    %v2250 = vadd.f32 %v2153, %v2249
    %v2251 = vpop.f32.mrb[0].mxu0
    %v2252 = vpop.f32.mrb[0].mxu0
    %v2253 = vadd.f32 %v2156, %v2252
    %v2254 = vpop.f32.mrb[0].mxu0
    %2255 = vmatprep.mubr.bf16.mxu0 %v1810
    %2256 = vmatmul.mubr.bf16.gmra.mrb[0].mxu0 %v1809
    %v2257 = vpop.f32.mrb[0].mxu0
    %v2258 = vadd.f32 %v2161, %v2257
    %v2259 = vpop.f32.mrb[0].mxu0
    %v2260 = vpop.f32.mrb[0].mxu0
    %v2261 = vadd.f32 %v2164, %v2260
    %v2262 = vpop.f32.mrb[0].mxu0
    %2263 = vmatprep.mubr.bf16.mxu0 %v1814
    %2264 = vmatmul.mubr.bf16.gmra.mrb[0].mxu0 %v1813
    %v2265 = vpop.f32.mrb[0].mxu0
    %v2266 = vadd.f32 %v2169, %v2265
    %v2267 = vpop.f32.mrb[0].mxu0
    %v2268 = vpop.f32.mrb[0].mxu0
    %v2269 = vadd.f32 %v2172, %v2268
    %v2270 = vpop.f32.mrb[0].mxu0
    %2271 = vdwg.mxu0
    %v2272 = vmax.f32 %v2210, 0.0
    %v2273 = vmax.f32 %v2213, 0.0
    %v2274 = vmax.f32 %v2218, 0.0
    %v2275 = vmax.f32 %v2221, 0.0
    %v2276 = vmax.f32 %v2226, 0.0
    %v2277 = vmax.f32 %v2229, 0.0
    %v2278 = vmax.f32 %v2234, 0.0
    %v2279 = vmax.f32 %v2237, 0.0
    %v2280 = vmax.f32 %v2242, 0.0
    %v2281 = vmax.f32 %v2245, 0.0
    %v2282 = vmax.f32 %v2250, 0.0
    %v2283 = vmax.f32 %v2253, 0.0
    %v2284 = vmax.f32 %v2258, 0.0
    %v2285 = vmax.f32 %v2261, 0.0
    %v2286 = vmax.f32 %v2266, 0.0
    %v2287 = vmax.f32 %v2269, 0.0
    %2288 = vst [vmem:[#allocation2] sm:$0xff] %v2272
    %2289 = vst [vmem:[#allocation2 + $0x8] sm:$0xff] %v2273
    %2290 = vst [vmem:[#allocation2 + $0x10] sm:$0xff] %v2274
    %2291 = vst [vmem:[#allocation2 + $0x18] sm:$0xff] %v2275
    %2292 = vst [vmem:[#allocation2 + $0x20] sm:$0xff] %v2276
    %2293 = vst [vmem:[#allocation2 + $0x28] sm:$0xff] %v2277
    %2294 = vst [vmem:[#allocation2 + $0x30] sm:$0xff] %v2278
    %2295 = vst [vmem:[#allocation2 + $0x38] sm:$0xff] %v2279
    %2296 = vst [vmem:[#allocation2 + $0x40] sm:$0xff] %v2280
    %2297 = vst [vmem:[#allocation2 + $0x48] sm:$0xff] %v2281
    %2298 = vst [vmem:[#allocation2 + $0x50] sm:$0xff] %v2282
    %2299 = vst [vmem:[#allocation2 + $0x58] sm:$0xff] %v2283
    %2300 = vst [vmem:[#allocation2 + $0x60] sm:$0xff] %v2284
    %2301 = vst [vmem:[#allocation2 + $0x68] sm:$0xff] %v2285
    %2302 = vst [vmem:[#allocation2 + $0x70] sm:$0xff] %v2286
    %2303 = vst [vmem:[#allocation2 + $0x78] sm:$0xff] %v2287
    // Predicated region
    $region30: #{query_encoder.1} parent=1 // pred_check
      _
    $region31: #{query_encoder.1} parent=1 // pred_check_branch
      %2305 = sbr.rel (0) target = $region33
    $region32: #{query_encoder.1} parent=1 // pred_region
      %s2307 = ssub.s32 2048, 2048
      %2308 = vsyncadd [#allocation3], %s2307
      %s2309 = sshll.u32 [#allocation2], 4
      %s2310 = int_to_ptr.vmem [resolvable:$true] %s2309
      %2315 = dma.vmem_to_hbm [thread:$0]  %s2310, 2048, %s7, [#allocation3], 128, 128, 8
    $region33: #{query_encoder.1} parent=1 // pred_fallthru
      _
    // Predicated region
    $region34: #{query_encoder.1} parent=1 // pred_check
      _
    $region35: #{query_encoder.1} parent=1 // pred_check_branch
      %2317 = sbr.rel (0) target = $region37
    $region36: #{query_encoder.1} parent=1 // pred_region
      %2318 = dma.done [#allocation3], 2048
    $region37: #{query_encoder.1} parent=1 // pred_fallthru
      _
    %2319 = vsyncpa [#allocation3], 1

</llo_original>
